<compile_context>
chip_gen: v5e
topology: v5e:2x2
jax: 0.10.0
libtpu: 0.0.40
codegen_flags: <defaults>
</compile_context>

<pallas_src>
import jax
import jax.numpy as jnp
from jax.experimental import pallas as pl
from jax.experimental.pallas import tpu as pltpu


# --------------------------------------------------------------------------
# Kernel 1: embedding gather + context mean  ->  (B, D) bf16
# --------------------------------------------------------------------------
def gather_mean_kernel(idx_ref, emb_hbm, mean_ref, gather_buf, sem):
    # idx_ref:    (B, C) int32, scalar-prefetched into SMEM
    # emb_hbm:    (V, D) f32, raw HBM ref (no auto-DMA)
    # mean_ref:   (B, D) bf16 output (VMEM)
    # gather_buf: (B*C, D) f32 VMEM scratch for gathered embedding rows
    # sem:        (1,) shared DMA semaphore for all row copies
    B, C = idx_ref.shape
    V_emb, _D = emb_hbm.shape

    # Issue all B*C row copies up front (overlapping DMAs, one shared sem),
    # then drain them.  Each copy is the same size, so shared-sem waits are
    # exact; all waits complete before any read of gather_buf.
    copies = []
    for t in range(B * C):                           # unrolled
        b, c = divmod(t, C)
        i = jnp.clip(idx_ref[b, c], 0, V_emb - 1)    # defensive bounds clamp
        cp = pltpu.make_async_copy(
            emb_hbm.at[pl.ds(i, 1), :],
            gather_buf.at[pl.ds(t, 1), :],
            sem.at[0],
        )
        cp.start()
        copies.append(cp)
    for cp in copies:
        cp.wait()

    inv_c = jnp.float32(1.0 / C)
    for b in range(B):                               # unrolled per batch row
        rows = gather_buf[pl.ds(b * C, C), :]        # (C, D) f32
        mean_ref[pl.ds(b, 1), :] = (
            rows.sum(axis=0, keepdims=True) * inv_c
        ).astype(mean_ref.dtype)


# --------------------------------------------------------------------------
# Kernel 2: linear layer  mean @ W_tile + bias_tile  (MXU, f32 accumulate)
# --------------------------------------------------------------------------
def linear_kernel(mean_ref, w_ref, b_ref, out_ref):
    # mean_ref: (B, D)  bf16 (full, tiny, re-fetched per tile)
    # w_ref:    (D, TN) bf16 weight tile (VMEM, pipelined)
    # b_ref:    (1, TN) f32 bias tile (VMEM, pipelined)
    # out_ref:  (B, TN) f32 output tile (VMEM, pipelined)
    out_ref[...] = (
        jnp.dot(mean_ref[...], w_ref[...], preferred_element_type=jnp.float32)
        + b_ref[...]
    ).astype(out_ref.dtype)


def _pick_tn(V, D, B, vmem_budget_bytes=24 << 20):
    """Largest lane-dense V tile (multiple of 128, divides V) whose
    double-buffered weight + bias + output slabs fit the VMEM budget.
    For small V (e.g. 2048) this returns tn = V -> single grid step."""
    # Per-output-column VMEM bytes: 2x weight (bf16) + 2x bias (f32) + 2x out (f32)
    per_col = 2 * (D * 2) + 2 * 4 + 2 * (B * 4)
    tn = min(V, max(128, (vmem_budget_bytes // per_col) // 128 * 128))
    while V % tn != 0:           # keep tn | V (tn=128 always works since V%128==0)
        tn -= 128
    return tn


def cbow_forward(idx, emb_table, w_t_bf16, bias):
    """idx (B,C) int32; emb_table (V,D) f32; w_t_bf16 (D,V) bf16 (Linear W^T,
    persisted in bf16); bias (1,V) f32.  Returns (B,V) f32 logits."""
    B, C = idx.shape
    V, D = emb_table.shape
    assert V % 128 == 0, "vocab size must be a multiple of 128"
    assert w_t_bf16.dtype == jnp.bfloat16, "persist the linear weight in bf16"

    # --- Phase 1: gather + mean (single-step precursor kernel) -------------
    mean_bf16 = pl.pallas_call(
        gather_mean_kernel,
        out_shape=jax.ShapeDtypeStruct((B, D), jnp.bfloat16),
        grid_spec=pltpu.PrefetchScalarGridSpec(
            num_scalar_prefetch=1,                   # idx -> SMEM
            grid=(1,),
            in_specs=[pl.BlockSpec(memory_space=pl.ANY)],          # emb (HBM)
            out_specs=pl.BlockSpec((B, D), lambda i, idx_ref: (0, 0)),
            scratch_shapes=[
                pltpu.VMEM((B * C, D), jnp.float32),  # gathered rows
                pltpu.SemaphoreType.DMA((1,)),        # one shared DMA sem
            ],
        ),
        compiler_params=pltpu.CompilerParams(
            dimension_semantics=("arbitrary",),
        ),
    )(idx, emb_table)

    # --- Phase 2: tiled linear over V, parallel grid (megacore-safe) -------
    tn = _pick_tn(V, D, B)
    return pl.pallas_call(
        linear_kernel,
        out_shape=jax.ShapeDtypeStruct((B, V), jnp.float32),
        grid_spec=pltpu.PrefetchScalarGridSpec(
            num_scalar_prefetch=0,
            grid=(V // tn,),
            in_specs=[
                pl.BlockSpec((B, D), lambda j: (0, 0)),     # mean (tiny)
                pl.BlockSpec((D, tn), lambda j: (0, j)),    # weight tile
                pl.BlockSpec((1, tn), lambda j: (0, j)),    # bias tile
            ],
            out_specs=pl.BlockSpec((B, tn), lambda j: (0, j)),
        ),
        compiler_params=pltpu.CompilerParams(
            dimension_semantics=("parallel",),       # no cross-step state
            vmem_limit_bytes=32 * 1024 * 1024,
        ),
    )(mean_bf16, w_t_bf16, bias)


if __name__ == "__main__":
    # vocab, embedding_dim (=128 per module), batch, context
    V, D, B, C = 2048, 128, 8, 4

    key = jax.random.PRNGKey(0)
    k1, k2, k3, k4 = jax.random.split(key, 4)
    emb_table = jax.random.normal(k1, (V, D), dtype=jnp.float32)
    w_t = jax.random.normal(k2, (D, V), dtype=jnp.float32) * 0.05   # Linear W^T
    bias = jax.random.normal(k3, (1, V), dtype=jnp.float32) * 0.01
    idx = jax.random.randint(k4, (B, C), 0, V, dtype=jnp.int32)

    # Persist the linear weight in bf16 once (not per forward call).
    w_t_bf16 = w_t.astype(jnp.bfloat16)

    out = cbow_forward(idx, emb_table, w_t_bf16, bias)
    out = jax.block_until_ready(out)

    # Pure-JAX reference matching the kernel's numerics (f32 gather/mean,
    # bf16 matmul with f32 accumulation, f32 bias add).
    mean_ref = emb_table[idx].mean(axis=1).astype(jnp.bfloat16)     # (B, D)
    ref = (
        jnp.dot(mean_ref, w_t_bf16, preferred_element_type=jnp.float32) + bias
    )

    assert out.shape == (B, V)
    assert jnp.allclose(out, ref, atol=1e-2, rtol=1e-2), (
        float(jnp.max(jnp.abs(out - ref))))

    print("KERNEL_OK")
</pallas_src>

<mosaic_0001>
module attributes {stable_mosaic.version = 11 : i64} {
  func.func @gather_mean_kernel(%arg0: i32, %arg1: memref<8x4xi32, #tpu.memory_space<smem>>, %arg2: memref<2048x128xf32, #tpu.memory_space<any>>, %arg3: memref<8x128xbf16, #tpu.memory_space<vmem>>, %arg4: memref<32x128xf32, #tpu.memory_space<vmem>>, %arg5: memref<1x!tpu.dma_semaphore, #tpu.memory_space<semaphore_mem>>) attributes {dimension_semantics = [#tpu.dimension_semantics<arbitrary>], iteration_bounds = array<i64: 1>, scalar_prefetch = 1 : i64, scratch_operands = 2 : i64, tpu.core_type = #tpu.core_type<tc>, window_params = [{}, {pipeline_mode = #tpu.pipeline_mode<synchronous>, transform_indices = @transform_1, window_bounds = array<i64: 8, 128>}]} {
    %c0 = arith.constant 0 : index
    %c0_0 = arith.constant 0 : index
    %0 = memref.load %arg1[%c0, %c0_0] : memref<8x4xi32, #tpu.memory_space<smem>>
    %c0_i32 = arith.constant 0 : i32
    %c2047_i32 = arith.constant 2047 : i32
    %1 = arith.maxsi %c0_i32, %0 : i32
    %2 = arith.minsi %c2047_i32, %1 : i32
    %c0_i32_1 = arith.constant 0 : i32
    %c0_i32_2 = arith.constant 0 : i32
    %3 = tpu.memref_slice %arg2[%2, %c0_i32_2] : memref<2048x128xf32, #tpu.memory_space<any>> -> memref<1x128xf32, #tpu.memory_space<any>>
    %c0_i32_3 = arith.constant 0 : i32
    %c0_i32_4 = arith.constant 0 : i32
    %4 = tpu.memref_slice %arg4[%c0_i32_3, %c0_i32_4] : memref<32x128xf32, #tpu.memory_space<vmem>> -> memref<1x128xf32, #tpu.memory_space<vmem>>
    %5 = tpu.memref_slice %arg5[%c0_i32_1] : memref<1x!tpu.dma_semaphore, #tpu.memory_space<semaphore_mem>> -> memref<1x!tpu.dma_semaphore, #tpu.memory_space<semaphore_mem>>
    %6 = tpu.memref_squeeze %5 : memref<1x!tpu.dma_semaphore, #tpu.memory_space<semaphore_mem>> -> memref<!tpu.dma_semaphore, #tpu.memory_space<semaphore_mem>>
    tpu.enqueue_dma source(%3 : memref<1x128xf32, #tpu.memory_space<any>>) target(%4 : memref<1x128xf32, #tpu.memory_space<vmem>>) target_semaphore(%6 : memref<!tpu.dma_semaphore, #tpu.memory_space<semaphore_mem>>)
    %c0_5 = arith.constant 0 : index
    %c1 = arith.constant 1 : index
    %7 = memref.load %arg1[%c0_5, %c1] : memref<8x4xi32, #tpu.memory_space<smem>>
    %c0_i32_6 = arith.constant 0 : i32
    %c2047_i32_7 = arith.constant 2047 : i32
    %8 = arith.maxsi %c0_i32_6, %7 : i32
    %9 = arith.minsi %c2047_i32_7, %8 : i32
    %c0_i32_8 = arith.constant 0 : i32
    %c0_i32_9 = arith.constant 0 : i32
    %10 = tpu.memref_slice %arg2[%9, %c0_i32_9] : memref<2048x128xf32, #tpu.memory_space<any>> -> memref<1x128xf32, #tpu.memory_space<any>>
    %c1_i32 = arith.constant 1 : i32
    %c0_i32_10 = arith.constant 0 : i32
    %11 = tpu.memref_slice %arg4[%c1_i32, %c0_i32_10] : memref<32x128xf32, #tpu.memory_space<vmem>> -> memref<1x128xf32, #tpu.memory_space<vmem>>
    %12 = tpu.memref_slice %arg5[%c0_i32_8] : memref<1x!tpu.dma_semaphore, #tpu.memory_space<semaphore_mem>> -> memref<1x!tpu.dma_semaphore, #tpu.memory_space<semaphore_mem>>
    %13 = tpu.memref_squeeze %12 : memref<1x!tpu.dma_semaphore, #tpu.memory_space<semaphore_mem>> -> memref<!tpu.dma_semaphore, #tpu.memory_space<semaphore_mem>>
    tpu.enqueue_dma source(%10 : memref<1x128xf32, #tpu.memory_space<any>>) target(%11 : memref<1x128xf32, #tpu.memory_space<vmem>>) target_semaphore(%13 : memref<!tpu.dma_semaphore, #tpu.memory_space<semaphore_mem>>)
    %c0_11 = arith.constant 0 : index
    %c2 = arith.constant 2 : index
    %14 = memref.load %arg1[%c0_11, %c2] : memref<8x4xi32, #tpu.memory_space<smem>>
    %c0_i32_12 = arith.constant 0 : i32
    %c2047_i32_13 = arith.constant 2047 : i32
    %15 = arith.maxsi %c0_i32_12, %14 : i32
    %16 = arith.minsi %c2047_i32_13, %15 : i32
    %c0_i32_14 = arith.constant 0 : i32
    %c0_i32_15 = arith.constant 0 : i32
    %17 = tpu.memref_slice %arg2[%16, %c0_i32_15] : memref<2048x128xf32, #tpu.memory_space<any>> -> memref<1x128xf32, #tpu.memory_space<any>>
    %c2_i32 = arith.constant 2 : i32
    %c0_i32_16 = arith.constant 0 : i32
    %18 = tpu.memref_slice %arg4[%c2_i32, %c0_i32_16] : memref<32x128xf32, #tpu.memory_space<vmem>> -> memref<1x128xf32, #tpu.memory_space<vmem>>
    %19 = tpu.memref_slice %arg5[%c0_i32_14] : memref<1x!tpu.dma_semaphore, #tpu.memory_space<semaphore_mem>> -> memref<1x!tpu.dma_semaphore, #tpu.memory_space<semaphore_mem>>
    %20 = tpu.memref_squeeze %19 : memref<1x!tpu.dma_semaphore, #tpu.memory_space<semaphore_mem>> -> memref<!tpu.dma_semaphore, #tpu.memory_space<semaphore_mem>>
    tpu.enqueue_dma source(%17 : memref<1x128xf32, #tpu.memory_space<any>>) target(%18 : memref<1x128xf32, #tpu.memory_space<vmem>>) target_semaphore(%20 : memref<!tpu.dma_semaphore, #tpu.memory_space<semaphore_mem>>)
    %c0_17 = arith.constant 0 : index
    %c3 = arith.constant 3 : index
    %21 = memref.load %arg1[%c0_17, %c3] : memref<8x4xi32, #tpu.memory_space<smem>>
    %c0_i32_18 = arith.constant 0 : i32
    %c2047_i32_19 = arith.constant 2047 : i32
    %22 = arith.maxsi %c0_i32_18, %21 : i32
    %23 = arith.minsi %c2047_i32_19, %22 : i32
    %c0_i32_20 = arith.constant 0 : i32
    %c0_i32_21 = arith.constant 0 : i32
    %24 = tpu.memref_slice %arg2[%23, %c0_i32_21] : memref<2048x128xf32, #tpu.memory_space<any>> -> memref<1x128xf32, #tpu.memory_space<any>>
    %c3_i32 = arith.constant 3 : i32
    %c0_i32_22 = arith.constant 0 : i32
    %25 = tpu.memref_slice %arg4[%c3_i32, %c0_i32_22] : memref<32x128xf32, #tpu.memory_space<vmem>> -> memref<1x128xf32, #tpu.memory_space<vmem>>
    %26 = tpu.memref_slice %arg5[%c0_i32_20] : memref<1x!tpu.dma_semaphore, #tpu.memory_space<semaphore_mem>> -> memref<1x!tpu.dma_semaphore, #tpu.memory_space<semaphore_mem>>
    %27 = tpu.memref_squeeze %26 : memref<1x!tpu.dma_semaphore, #tpu.memory_space<semaphore_mem>> -> memref<!tpu.dma_semaphore, #tpu.memory_space<semaphore_mem>>
    tpu.enqueue_dma source(%24 : memref<1x128xf32, #tpu.memory_space<any>>) target(%25 : memref<1x128xf32, #tpu.memory_space<vmem>>) target_semaphore(%27 : memref<!tpu.dma_semaphore, #tpu.memory_space<semaphore_mem>>)
    %c1_23 = arith.constant 1 : index
    %c0_24 = arith.constant 0 : index
    %28 = memref.load %arg1[%c1_23, %c0_24] : memref<8x4xi32, #tpu.memory_space<smem>>
    %c0_i32_25 = arith.constant 0 : i32
    %c2047_i32_26 = arith.constant 2047 : i32
    %29 = arith.maxsi %c0_i32_25, %28 : i32
    %30 = arith.minsi %c2047_i32_26, %29 : i32
    %c0_i32_27 = arith.constant 0 : i32
    %c0_i32_28 = arith.constant 0 : i32
    %31 = tpu.memref_slice %arg2[%30, %c0_i32_28] : memref<2048x128xf32, #tpu.memory_space<any>> -> memref<1x128xf32, #tpu.memory_space<any>>
    %c4_i32 = arith.constant 4 : i32
    %c0_i32_29 = arith.constant 0 : i32
    %32 = tpu.memref_slice %arg4[%c4_i32, %c0_i32_29] : memref<32x128xf32, #tpu.memory_space<vmem>> -> memref<1x128xf32, #tpu.memory_space<vmem>>
    %33 = tpu.memref_slice %arg5[%c0_i32_27] : memref<1x!tpu.dma_semaphore, #tpu.memory_space<semaphore_mem>> -> memref<1x!tpu.dma_semaphore, #tpu.memory_space<semaphore_mem>>
    %34 = tpu.memref_squeeze %33 : memref<1x!tpu.dma_semaphore, #tpu.memory_space<semaphore_mem>> -> memref<!tpu.dma_semaphore, #tpu.memory_space<semaphore_mem>>
    tpu.enqueue_dma source(%31 : memref<1x128xf32, #tpu.memory_space<any>>) target(%32 : memref<1x128xf32, #tpu.memory_space<vmem>>) target_semaphore(%34 : memref<!tpu.dma_semaphore, #tpu.memory_space<semaphore_mem>>)
    %c1_30 = arith.constant 1 : index
    %c1_31 = arith.constant 1 : index
    %35 = memref.load %arg1[%c1_30, %c1_31] : memref<8x4xi32, #tpu.memory_space<smem>>
    %c0_i32_32 = arith.constant 0 : i32
    %c2047_i32_33 = arith.constant 2047 : i32
    %36 = arith.maxsi %c0_i32_32, %35 : i32
    %37 = arith.minsi %c2047_i32_33, %36 : i32
    %c0_i32_34 = arith.constant 0 : i32
    %c0_i32_35 = arith.constant 0 : i32
    %38 = tpu.memref_slice %arg2[%37, %c0_i32_35] : memref<2048x128xf32, #tpu.memory_space<any>> -> memref<1x128xf32, #tpu.memory_space<any>>
    %c5_i32 = arith.constant 5 : i32
    %c0_i32_36 = arith.constant 0 : i32
    %39 = tpu.memref_slice %arg4[%c5_i32, %c0_i32_36] : memref<32x128xf32, #tpu.memory_space<vmem>> -> memref<1x128xf32, #tpu.memory_space<vmem>>
    %40 = tpu.memref_slice %arg5[%c0_i32_34] : memref<1x!tpu.dma_semaphore, #tpu.memory_space<semaphore_mem>> -> memref<1x!tpu.dma_semaphore, #tpu.memory_space<semaphore_mem>>
    %41 = tpu.memref_squeeze %40 : memref<1x!tpu.dma_semaphore, #tpu.memory_space<semaphore_mem>> -> memref<!tpu.dma_semaphore, #tpu.memory_space<semaphore_mem>>
    tpu.enqueue_dma source(%38 : memref<1x128xf32, #tpu.memory_space<any>>) target(%39 : memref<1x128xf32, #tpu.memory_space<vmem>>) target_semaphore(%41 : memref<!tpu.dma_semaphore, #tpu.memory_space<semaphore_mem>>)
    %c1_37 = arith.constant 1 : index
    %c2_38 = arith.constant 2 : index
    %42 = memref.load %arg1[%c1_37, %c2_38] : memref<8x4xi32, #tpu.memory_space<smem>>
    %c0_i32_39 = arith.constant 0 : i32
    %c2047_i32_40 = arith.constant 2047 : i32
    %43 = arith.maxsi %c0_i32_39, %42 : i32
    %44 = arith.minsi %c2047_i32_40, %43 : i32
    %c0_i32_41 = arith.constant 0 : i32
    %c0_i32_42 = arith.constant 0 : i32
    %45 = tpu.memref_slice %arg2[%44, %c0_i32_42] : memref<2048x128xf32, #tpu.memory_space<any>> -> memref<1x128xf32, #tpu.memory_space<any>>
    %c6_i32 = arith.constant 6 : i32
    %c0_i32_43 = arith.constant 0 : i32
    %46 = tpu.memref_slice %arg4[%c6_i32, %c0_i32_43] : memref<32x128xf32, #tpu.memory_space<vmem>> -> memref<1x128xf32, #tpu.memory_space<vmem>>
    %47 = tpu.memref_slice %arg5[%c0_i32_41] : memref<1x!tpu.dma_semaphore, #tpu.memory_space<semaphore_mem>> -> memref<1x!tpu.dma_semaphore, #tpu.memory_space<semaphore_mem>>
    %48 = tpu.memref_squeeze %47 : memref<1x!tpu.dma_semaphore, #tpu.memory_space<semaphore_mem>> -> memref<!tpu.dma_semaphore, #tpu.memory_space<semaphore_mem>>
    tpu.enqueue_dma source(%45 : memref<1x128xf32, #tpu.memory_space<any>>) target(%46 : memref<1x128xf32, #tpu.memory_space<vmem>>) target_semaphore(%48 : memref<!tpu.dma_semaphore, #tpu.memory_space<semaphore_mem>>)
    %c1_44 = arith.constant 1 : index
    %c3_45 = arith.constant 3 : index
    %49 = memref.load %arg1[%c1_44, %c3_45] : memref<8x4xi32, #tpu.memory_space<smem>>
    %c0_i32_46 = arith.constant 0 : i32
    %c2047_i32_47 = arith.constant 2047 : i32
    %50 = arith.maxsi %c0_i32_46, %49 : i32
    %51 = arith.minsi %c2047_i32_47, %50 : i32
    %c0_i32_48 = arith.constant 0 : i32
    %c0_i32_49 = arith.constant 0 : i32
    %52 = tpu.memref_slice %arg2[%51, %c0_i32_49] : memref<2048x128xf32, #tpu.memory_space<any>> -> memref<1x128xf32, #tpu.memory_space<any>>
    %c7_i32 = arith.constant 7 : i32
    %c0_i32_50 = arith.constant 0 : i32
    %53 = tpu.memref_slice %arg4[%c7_i32, %c0_i32_50] : memref<32x128xf32, #tpu.memory_space<vmem>> -> memref<1x128xf32, #tpu.memory_space<vmem>>
    %54 = tpu.memref_slice %arg5[%c0_i32_48] : memref<1x!tpu.dma_semaphore, #tpu.memory_space<semaphore_mem>> -> memref<1x!tpu.dma_semaphore, #tpu.memory_space<semaphore_mem>>
    %55 = tpu.memref_squeeze %54 : memref<1x!tpu.dma_semaphore, #tpu.memory_space<semaphore_mem>> -> memref<!tpu.dma_semaphore, #tpu.memory_space<semaphore_mem>>
    tpu.enqueue_dma source(%52 : memref<1x128xf32, #tpu.memory_space<any>>) target(%53 : memref<1x128xf32, #tpu.memory_space<vmem>>) target_semaphore(%55 : memref<!tpu.dma_semaphore, #tpu.memory_space<semaphore_mem>>)
    %c2_51 = arith.constant 2 : index
    %c0_52 = arith.constant 0 : index
    %56 = memref.load %arg1[%c2_51, %c0_52] : memref<8x4xi32, #tpu.memory_space<smem>>
    %c0_i32_53 = arith.constant 0 : i32
    %c2047_i32_54 = arith.constant 2047 : i32
    %57 = arith.maxsi %c0_i32_53, %56 : i32
    %58 = arith.minsi %c2047_i32_54, %57 : i32
    %c0_i32_55 = arith.constant 0 : i32
    %c0_i32_56 = arith.constant 0 : i32
    %59 = tpu.memref_slice %arg2[%58, %c0_i32_56] : memref<2048x128xf32, #tpu.memory_space<any>> -> memref<1x128xf32, #tpu.memory_space<any>>
    %c8_i32 = arith.constant 8 : i32
    %c0_i32_57 = arith.constant 0 : i32
    %60 = tpu.memref_slice %arg4[%c8_i32, %c0_i32_57] : memref<32x128xf32, #tpu.memory_space<vmem>> -> memref<1x128xf32, #tpu.memory_space<vmem>>
    %61 = tpu.memref_slice %arg5[%c0_i32_55] : memref<1x!tpu.dma_semaphore, #tpu.memory_space<semaphore_mem>> -> memref<1x!tpu.dma_semaphore, #tpu.memory_space<semaphore_mem>>
    %62 = tpu.memref_squeeze %61 : memref<1x!tpu.dma_semaphore, #tpu.memory_space<semaphore_mem>> -> memref<!tpu.dma_semaphore, #tpu.memory_space<semaphore_mem>>
    tpu.enqueue_dma source(%59 : memref<1x128xf32, #tpu.memory_space<any>>) target(%60 : memref<1x128xf32, #tpu.memory_space<vmem>>) target_semaphore(%62 : memref<!tpu.dma_semaphore, #tpu.memory_space<semaphore_mem>>)
    %c2_58 = arith.constant 2 : index
    %c1_59 = arith.constant 1 : index
    %63 = memref.load %arg1[%c2_58, %c1_59] : memref<8x4xi32, #tpu.memory_space<smem>>
    %c0_i32_60 = arith.constant 0 : i32
    %c2047_i32_61 = arith.constant 2047 : i32
    %64 = arith.maxsi %c0_i32_60, %63 : i32
    %65 = arith.minsi %c2047_i32_61, %64 : i32
    %c0_i32_62 = arith.constant 0 : i32
    %c0_i32_63 = arith.constant 0 : i32
    %66 = tpu.memref_slice %arg2[%65, %c0_i32_63] : memref<2048x128xf32, #tpu.memory_space<any>> -> memref<1x128xf32, #tpu.memory_space<any>>
    %c9_i32 = arith.constant 9 : i32
    %c0_i32_64 = arith.constant 0 : i32
    %67 = tpu.memref_slice %arg4[%c9_i32, %c0_i32_64] : memref<32x128xf32, #tpu.memory_space<vmem>> -> memref<1x128xf32, #tpu.memory_space<vmem>>
    %68 = tpu.memref_slice %arg5[%c0_i32_62] : memref<1x!tpu.dma_semaphore, #tpu.memory_space<semaphore_mem>> -> memref<1x!tpu.dma_semaphore, #tpu.memory_space<semaphore_mem>>
    %69 = tpu.memref_squeeze %68 : memref<1x!tpu.dma_semaphore, #tpu.memory_space<semaphore_mem>> -> memref<!tpu.dma_semaphore, #tpu.memory_space<semaphore_mem>>
    tpu.enqueue_dma source(%66 : memref<1x128xf32, #tpu.memory_space<any>>) target(%67 : memref<1x128xf32, #tpu.memory_space<vmem>>) target_semaphore(%69 : memref<!tpu.dma_semaphore, #tpu.memory_space<semaphore_mem>>)
    %c2_65 = arith.constant 2 : index
    %c2_66 = arith.constant 2 : index
    %70 = memref.load %arg1[%c2_65, %c2_66] : memref<8x4xi32, #tpu.memory_space<smem>>
    %c0_i32_67 = arith.constant 0 : i32
    %c2047_i32_68 = arith.constant 2047 : i32
    %71 = arith.maxsi %c0_i32_67, %70 : i32
    %72 = arith.minsi %c2047_i32_68, %71 : i32
    %c0_i32_69 = arith.constant 0 : i32
    %c0_i32_70 = arith.constant 0 : i32
    %73 = tpu.memref_slice %arg2[%72, %c0_i32_70] : memref<2048x128xf32, #tpu.memory_space<any>> -> memref<1x128xf32, #tpu.memory_space<any>>
    %c10_i32 = arith.constant 10 : i32
    %c0_i32_71 = arith.constant 0 : i32
    %74 = tpu.memref_slice %arg4[%c10_i32, %c0_i32_71] : memref<32x128xf32, #tpu.memory_space<vmem>> -> memref<1x128xf32, #tpu.memory_space<vmem>>
    %75 = tpu.memref_slice %arg5[%c0_i32_69] : memref<1x!tpu.dma_semaphore, #tpu.memory_space<semaphore_mem>> -> memref<1x!tpu.dma_semaphore, #tpu.memory_space<semaphore_mem>>
    %76 = tpu.memref_squeeze %75 : memref<1x!tpu.dma_semaphore, #tpu.memory_space<semaphore_mem>> -> memref<!tpu.dma_semaphore, #tpu.memory_space<semaphore_mem>>
    tpu.enqueue_dma source(%73 : memref<1x128xf32, #tpu.memory_space<any>>) target(%74 : memref<1x128xf32, #tpu.memory_space<vmem>>) target_semaphore(%76 : memref<!tpu.dma_semaphore, #tpu.memory_space<semaphore_mem>>)
    %c2_72 = arith.constant 2 : index
    %c3_73 = arith.constant 3 : index
    %77 = memref.load %arg1[%c2_72, %c3_73] : memref<8x4xi32, #tpu.memory_space<smem>>
    %c0_i32_74 = arith.constant 0 : i32
    %c2047_i32_75 = arith.constant 2047 : i32
    %78 = arith.maxsi %c0_i32_74, %77 : i32
    %79 = arith.minsi %c2047_i32_75, %78 : i32
    %c0_i32_76 = arith.constant 0 : i32
    %c0_i32_77 = arith.constant 0 : i32
    %80 = tpu.memref_slice %arg2[%79, %c0_i32_77] : memref<2048x128xf32, #tpu.memory_space<any>> -> memref<1x128xf32, #tpu.memory_space<any>>
    %c11_i32 = arith.constant 11 : i32
    %c0_i32_78 = arith.constant 0 : i32
    %81 = tpu.memref_slice %arg4[%c11_i32, %c0_i32_78] : memref<32x128xf32, #tpu.memory_space<vmem>> -> memref<1x128xf32, #tpu.memory_space<vmem>>
    %82 = tpu.memref_slice %arg5[%c0_i32_76] : memref<1x!tpu.dma_semaphore, #tpu.memory_space<semaphore_mem>> -> memref<1x!tpu.dma_semaphore, #tpu.memory_space<semaphore_mem>>
    %83 = tpu.memref_squeeze %82 : memref<1x!tpu.dma_semaphore, #tpu.memory_space<semaphore_mem>> -> memref<!tpu.dma_semaphore, #tpu.memory_space<semaphore_mem>>
    tpu.enqueue_dma source(%80 : memref<1x128xf32, #tpu.memory_space<any>>) target(%81 : memref<1x128xf32, #tpu.memory_space<vmem>>) target_semaphore(%83 : memref<!tpu.dma_semaphore, #tpu.memory_space<semaphore_mem>>)
    %c3_79 = arith.constant 3 : index
    %c0_80 = arith.constant 0 : index
    %84 = memref.load %arg1[%c3_79, %c0_80] : memref<8x4xi32, #tpu.memory_space<smem>>
    %c0_i32_81 = arith.constant 0 : i32
    %c2047_i32_82 = arith.constant 2047 : i32
    %85 = arith.maxsi %c0_i32_81, %84 : i32
    %86 = arith.minsi %c2047_i32_82, %85 : i32
    %c0_i32_83 = arith.constant 0 : i32
    %c0_i32_84 = arith.constant 0 : i32
    %87 = tpu.memref_slice %arg2[%86, %c0_i32_84] : memref<2048x128xf32, #tpu.memory_space<any>> -> memref<1x128xf32, #tpu.memory_space<any>>
    %c12_i32 = arith.constant 12 : i32
    %c0_i32_85 = arith.constant 0 : i32
    %88 = tpu.memref_slice %arg4[%c12_i32, %c0_i32_85] : memref<32x128xf32, #tpu.memory_space<vmem>> -> memref<1x128xf32, #tpu.memory_space<vmem>>
    %89 = tpu.memref_slice %arg5[%c0_i32_83] : memref<1x!tpu.dma_semaphore, #tpu.memory_space<semaphore_mem>> -> memref<1x!tpu.dma_semaphore, #tpu.memory_space<semaphore_mem>>
    %90 = tpu.memref_squeeze %89 : memref<1x!tpu.dma_semaphore, #tpu.memory_space<semaphore_mem>> -> memref<!tpu.dma_semaphore, #tpu.memory_space<semaphore_mem>>
    tpu.enqueue_dma source(%87 : memref<1x128xf32, #tpu.memory_space<any>>) target(%88 : memref<1x128xf32, #tpu.memory_space<vmem>>) target_semaphore(%90 : memref<!tpu.dma_semaphore, #tpu.memory_space<semaphore_mem>>)
    %c3_86 = arith.constant 3 : index
    %c1_87 = arith.constant 1 : index
    %91 = memref.load %arg1[%c3_86, %c1_87] : memref<8x4xi32, #tpu.memory_space<smem>>
    %c0_i32_88 = arith.constant 0 : i32
    %c2047_i32_89 = arith.constant 2047 : i32
    %92 = arith.maxsi %c0_i32_88, %91 : i32
    %93 = arith.minsi %c2047_i32_89, %92 : i32
    %c0_i32_90 = arith.constant 0 : i32
    %c0_i32_91 = arith.constant 0 : i32
    %94 = tpu.memref_slice %arg2[%93, %c0_i32_91] : memref<2048x128xf32, #tpu.memory_space<any>> -> memref<1x128xf32, #tpu.memory_space<any>>
    %c13_i32 = arith.constant 13 : i32
    %c0_i32_92 = arith.constant 0 : i32
    %95 = tpu.memref_slice %arg4[%c13_i32, %c0_i32_92] : memref<32x128xf32, #tpu.memory_space<vmem>> -> memref<1x128xf32, #tpu.memory_space<vmem>>
    %96 = tpu.memref_slice %arg5[%c0_i32_90] : memref<1x!tpu.dma_semaphore, #tpu.memory_space<semaphore_mem>> -> memref<1x!tpu.dma_semaphore, #tpu.memory_space<semaphore_mem>>
    %97 = tpu.memref_squeeze %96 : memref<1x!tpu.dma_semaphore, #tpu.memory_space<semaphore_mem>> -> memref<!tpu.dma_semaphore, #tpu.memory_space<semaphore_mem>>
    tpu.enqueue_dma source(%94 : memref<1x128xf32, #tpu.memory_space<any>>) target(%95 : memref<1x128xf32, #tpu.memory_space<vmem>>) target_semaphore(%97 : memref<!tpu.dma_semaphore, #tpu.memory_space<semaphore_mem>>)
    %c3_93 = arith.constant 3 : index
    %c2_94 = arith.constant 2 : index
    %98 = memref.load %arg1[%c3_93, %c2_94] : memref<8x4xi32, #tpu.memory_space<smem>>
    %c0_i32_95 = arith.constant 0 : i32
    %c2047_i32_96 = arith.constant 2047 : i32
    %99 = arith.maxsi %c0_i32_95, %98 : i32
    %100 = arith.minsi %c2047_i32_96, %99 : i32
    %c0_i32_97 = arith.constant 0 : i32
    %c0_i32_98 = arith.constant 0 : i32
    %101 = tpu.memref_slice %arg2[%100, %c0_i32_98] : memref<2048x128xf32, #tpu.memory_space<any>> -> memref<1x128xf32, #tpu.memory_space<any>>
    %c14_i32 = arith.constant 14 : i32
    %c0_i32_99 = arith.constant 0 : i32
    %102 = tpu.memref_slice %arg4[%c14_i32, %c0_i32_99] : memref<32x128xf32, #tpu.memory_space<vmem>> -> memref<1x128xf32, #tpu.memory_space<vmem>>
    %103 = tpu.memref_slice %arg5[%c0_i32_97] : memref<1x!tpu.dma_semaphore, #tpu.memory_space<semaphore_mem>> -> memref<1x!tpu.dma_semaphore, #tpu.memory_space<semaphore_mem>>
    %104 = tpu.memref_squeeze %103 : memref<1x!tpu.dma_semaphore, #tpu.memory_space<semaphore_mem>> -> memref<!tpu.dma_semaphore, #tpu.memory_space<semaphore_mem>>
    tpu.enqueue_dma source(%101 : memref<1x128xf32, #tpu.memory_space<any>>) target(%102 : memref<1x128xf32, #tpu.memory_space<vmem>>) target_semaphore(%104 : memref<!tpu.dma_semaphore, #tpu.memory_space<semaphore_mem>>)
    %c3_100 = arith.constant 3 : index
    %c3_101 = arith.constant 3 : index
    %105 = memref.load %arg1[%c3_100, %c3_101] : memref<8x4xi32, #tpu.memory_space<smem>>
    %c0_i32_102 = arith.constant 0 : i32
    %c2047_i32_103 = arith.constant 2047 : i32
    %106 = arith.maxsi %c0_i32_102, %105 : i32
    %107 = arith.minsi %c2047_i32_103, %106 : i32
    %c0_i32_104 = arith.constant 0 : i32
    %c0_i32_105 = arith.constant 0 : i32
    %108 = tpu.memref_slice %arg2[%107, %c0_i32_105] : memref<2048x128xf32, #tpu.memory_space<any>> -> memref<1x128xf32, #tpu.memory_space<any>>
    %c15_i32 = arith.constant 15 : i32
    %c0_i32_106 = arith.constant 0 : i32
    %109 = tpu.memref_slice %arg4[%c15_i32, %c0_i32_106] : memref<32x128xf32, #tpu.memory_space<vmem>> -> memref<1x128xf32, #tpu.memory_space<vmem>>
    %110 = tpu.memref_slice %arg5[%c0_i32_104] : memref<1x!tpu.dma_semaphore, #tpu.memory_space<semaphore_mem>> -> memref<1x!tpu.dma_semaphore, #tpu.memory_space<semaphore_mem>>
    %111 = tpu.memref_squeeze %110 : memref<1x!tpu.dma_semaphore, #tpu.memory_space<semaphore_mem>> -> memref<!tpu.dma_semaphore, #tpu.memory_space<semaphore_mem>>
    tpu.enqueue_dma source(%108 : memref<1x128xf32, #tpu.memory_space<any>>) target(%109 : memref<1x128xf32, #tpu.memory_space<vmem>>) target_semaphore(%111 : memref<!tpu.dma_semaphore, #tpu.memory_space<semaphore_mem>>)
    %c4 = arith.constant 4 : index
    %c0_107 = arith.constant 0 : index
    %112 = memref.load %arg1[%c4, %c0_107] : memref<8x4xi32, #tpu.memory_space<smem>>
    %c0_i32_108 = arith.constant 0 : i32
    %c2047_i32_109 = arith.constant 2047 : i32
    %113 = arith.maxsi %c0_i32_108, %112 : i32
    %114 = arith.minsi %c2047_i32_109, %113 : i32
    %c0_i32_110 = arith.constant 0 : i32
    %c0_i32_111 = arith.constant 0 : i32
    %115 = tpu.memref_slice %arg2[%114, %c0_i32_111] : memref<2048x128xf32, #tpu.memory_space<any>> -> memref<1x128xf32, #tpu.memory_space<any>>
    %c16_i32 = arith.constant 16 : i32
    %c0_i32_112 = arith.constant 0 : i32
    %116 = tpu.memref_slice %arg4[%c16_i32, %c0_i32_112] : memref<32x128xf32, #tpu.memory_space<vmem>> -> memref<1x128xf32, #tpu.memory_space<vmem>>
    %117 = tpu.memref_slice %arg5[%c0_i32_110] : memref<1x!tpu.dma_semaphore, #tpu.memory_space<semaphore_mem>> -> memref<1x!tpu.dma_semaphore, #tpu.memory_space<semaphore_mem>>
    %118 = tpu.memref_squeeze %117 : memref<1x!tpu.dma_semaphore, #tpu.memory_space<semaphore_mem>> -> memref<!tpu.dma_semaphore, #tpu.memory_space<semaphore_mem>>
    tpu.enqueue_dma source(%115 : memref<1x128xf32, #tpu.memory_space<any>>) target(%116 : memref<1x128xf32, #tpu.memory_space<vmem>>) target_semaphore(%118 : memref<!tpu.dma_semaphore, #tpu.memory_space<semaphore_mem>>)
    %c4_113 = arith.constant 4 : index
    %c1_114 = arith.constant 1 : index
    %119 = memref.load %arg1[%c4_113, %c1_114] : memref<8x4xi32, #tpu.memory_space<smem>>
    %c0_i32_115 = arith.constant 0 : i32
    %c2047_i32_116 = arith.constant 2047 : i32
    %120 = arith.maxsi %c0_i32_115, %119 : i32
    %121 = arith.minsi %c2047_i32_116, %120 : i32
    %c0_i32_117 = arith.constant 0 : i32
    %c0_i32_118 = arith.constant 0 : i32
    %122 = tpu.memref_slice %arg2[%121, %c0_i32_118] : memref<2048x128xf32, #tpu.memory_space<any>> -> memref<1x128xf32, #tpu.memory_space<any>>
    %c17_i32 = arith.constant 17 : i32
    %c0_i32_119 = arith.constant 0 : i32
    %123 = tpu.memref_slice %arg4[%c17_i32, %c0_i32_119] : memref<32x128xf32, #tpu.memory_space<vmem>> -> memref<1x128xf32, #tpu.memory_space<vmem>>
    %124 = tpu.memref_slice %arg5[%c0_i32_117] : memref<1x!tpu.dma_semaphore, #tpu.memory_space<semaphore_mem>> -> memref<1x!tpu.dma_semaphore, #tpu.memory_space<semaphore_mem>>
    %125 = tpu.memref_squeeze %124 : memref<1x!tpu.dma_semaphore, #tpu.memory_space<semaphore_mem>> -> memref<!tpu.dma_semaphore, #tpu.memory_space<semaphore_mem>>
    tpu.enqueue_dma source(%122 : memref<1x128xf32, #tpu.memory_space<any>>) target(%123 : memref<1x128xf32, #tpu.memory_space<vmem>>) target_semaphore(%125 : memref<!tpu.dma_semaphore, #tpu.memory_space<semaphore_mem>>)
    %c4_120 = arith.constant 4 : index
    %c2_121 = arith.constant 2 : index
    %126 = memref.load %arg1[%c4_120, %c2_121] : memref<8x4xi32, #tpu.memory_space<smem>>
    %c0_i32_122 = arith.constant 0 : i32
    %c2047_i32_123 = arith.constant 2047 : i32
    %127 = arith.maxsi %c0_i32_122, %126 : i32
    %128 = arith.minsi %c2047_i32_123, %127 : i32
    %c0_i32_124 = arith.constant 0 : i32
    %c0_i32_125 = arith.constant 0 : i32
    %129 = tpu.memref_slice %arg2[%128, %c0_i32_125] : memref<2048x128xf32, #tpu.memory_space<any>> -> memref<1x128xf32, #tpu.memory_space<any>>
    %c18_i32 = arith.constant 18 : i32
    %c0_i32_126 = arith.constant 0 : i32
    %130 = tpu.memref_slice %arg4[%c18_i32, %c0_i32_126] : memref<32x128xf32, #tpu.memory_space<vmem>> -> memref<1x128xf32, #tpu.memory_space<vmem>>
    %131 = tpu.memref_slice %arg5[%c0_i32_124] : memref<1x!tpu.dma_semaphore, #tpu.memory_space<semaphore_mem>> -> memref<1x!tpu.dma_semaphore, #tpu.memory_space<semaphore_mem>>
    %132 = tpu.memref_squeeze %131 : memref<1x!tpu.dma_semaphore, #tpu.memory_space<semaphore_mem>> -> memref<!tpu.dma_semaphore, #tpu.memory_space<semaphore_mem>>
    tpu.enqueue_dma source(%129 : memref<1x128xf32, #tpu.memory_space<any>>) target(%130 : memref<1x128xf32, #tpu.memory_space<vmem>>) target_semaphore(%132 : memref<!tpu.dma_semaphore, #tpu.memory_space<semaphore_mem>>)
    %c4_127 = arith.constant 4 : index
    %c3_128 = arith.constant 3 : index
    %133 = memref.load %arg1[%c4_127, %c3_128] : memref<8x4xi32, #tpu.memory_space<smem>>
    %c0_i32_129 = arith.constant 0 : i32
    %c2047_i32_130 = arith.constant 2047 : i32
    %134 = arith.maxsi %c0_i32_129, %133 : i32
    %135 = arith.minsi %c2047_i32_130, %134 : i32
    %c0_i32_131 = arith.constant 0 : i32
    %c0_i32_132 = arith.constant 0 : i32
    %136 = tpu.memref_slice %arg2[%135, %c0_i32_132] : memref<2048x128xf32, #tpu.memory_space<any>> -> memref<1x128xf32, #tpu.memory_space<any>>
    %c19_i32 = arith.constant 19 : i32
    %c0_i32_133 = arith.constant 0 : i32
    %137 = tpu.memref_slice %arg4[%c19_i32, %c0_i32_133] : memref<32x128xf32, #tpu.memory_space<vmem>> -> memref<1x128xf32, #tpu.memory_space<vmem>>
    %138 = tpu.memref_slice %arg5[%c0_i32_131] : memref<1x!tpu.dma_semaphore, #tpu.memory_space<semaphore_mem>> -> memref<1x!tpu.dma_semaphore, #tpu.memory_space<semaphore_mem>>
    %139 = tpu.memref_squeeze %138 : memref<1x!tpu.dma_semaphore, #tpu.memory_space<semaphore_mem>> -> memref<!tpu.dma_semaphore, #tpu.memory_space<semaphore_mem>>
    tpu.enqueue_dma source(%136 : memref<1x128xf32, #tpu.memory_space<any>>) target(%137 : memref<1x128xf32, #tpu.memory_space<vmem>>) target_semaphore(%139 : memref<!tpu.dma_semaphore, #tpu.memory_space<semaphore_mem>>)
    %c5 = arith.constant 5 : index
    %c0_134 = arith.constant 0 : index
    %140 = memref.load %arg1[%c5, %c0_134] : memref<8x4xi32, #tpu.memory_space<smem>>
    %c0_i32_135 = arith.constant 0 : i32
    %c2047_i32_136 = arith.constant 2047 : i32
    %141 = arith.maxsi %c0_i32_135, %140 : i32
    %142 = arith.minsi %c2047_i32_136, %141 : i32
    %c0_i32_137 = arith.constant 0 : i32
    %c0_i32_138 = arith.constant 0 : i32
    %143 = tpu.memref_slice %arg2[%142, %c0_i32_138] : memref<2048x128xf32, #tpu.memory_space<any>> -> memref<1x128xf32, #tpu.memory_space<any>>
    %c20_i32 = arith.constant 20 : i32
    %c0_i32_139 = arith.constant 0 : i32
    %144 = tpu.memref_slice %arg4[%c20_i32, %c0_i32_139] : memref<32x128xf32, #tpu.memory_space<vmem>> -> memref<1x128xf32, #tpu.memory_space<vmem>>
    %145 = tpu.memref_slice %arg5[%c0_i32_137] : memref<1x!tpu.dma_semaphore, #tpu.memory_space<semaphore_mem>> -> memref<1x!tpu.dma_semaphore, #tpu.memory_space<semaphore_mem>>
    %146 = tpu.memref_squeeze %145 : memref<1x!tpu.dma_semaphore, #tpu.memory_space<semaphore_mem>> -> memref<!tpu.dma_semaphore, #tpu.memory_space<semaphore_mem>>
    tpu.enqueue_dma source(%143 : memref<1x128xf32, #tpu.memory_space<any>>) target(%144 : memref<1x128xf32, #tpu.memory_space<vmem>>) target_semaphore(%146 : memref<!tpu.dma_semaphore, #tpu.memory_space<semaphore_mem>>)
    %c5_140 = arith.constant 5 : index
    %c1_141 = arith.constant 1 : index
    %147 = memref.load %arg1[%c5_140, %c1_141] : memref<8x4xi32, #tpu.memory_space<smem>>
    %c0_i32_142 = arith.constant 0 : i32
    %c2047_i32_143 = arith.constant 2047 : i32
    %148 = arith.maxsi %c0_i32_142, %147 : i32
    %149 = arith.minsi %c2047_i32_143, %148 : i32
    %c0_i32_144 = arith.constant 0 : i32
    %c0_i32_145 = arith.constant 0 : i32
    %150 = tpu.memref_slice %arg2[%149, %c0_i32_145] : memref<2048x128xf32, #tpu.memory_space<any>> -> memref<1x128xf32, #tpu.memory_space<any>>
    %c21_i32 = arith.constant 21 : i32
    %c0_i32_146 = arith.constant 0 : i32
    %151 = tpu.memref_slice %arg4[%c21_i32, %c0_i32_146] : memref<32x128xf32, #tpu.memory_space<vmem>> -> memref<1x128xf32, #tpu.memory_space<vmem>>
    %152 = tpu.memref_slice %arg5[%c0_i32_144] : memref<1x!tpu.dma_semaphore, #tpu.memory_space<semaphore_mem>> -> memref<1x!tpu.dma_semaphore, #tpu.memory_space<semaphore_mem>>
    %153 = tpu.memref_squeeze %152 : memref<1x!tpu.dma_semaphore, #tpu.memory_space<semaphore_mem>> -> memref<!tpu.dma_semaphore, #tpu.memory_space<semaphore_mem>>
    tpu.enqueue_dma source(%150 : memref<1x128xf32, #tpu.memory_space<any>>) target(%151 : memref<1x128xf32, #tpu.memory_space<vmem>>) target_semaphore(%153 : memref<!tpu.dma_semaphore, #tpu.memory_space<semaphore_mem>>)
    %c5_147 = arith.constant 5 : index
    %c2_148 = arith.constant 2 : index
    %154 = memref.load %arg1[%c5_147, %c2_148] : memref<8x4xi32, #tpu.memory_space<smem>>
    %c0_i32_149 = arith.constant 0 : i32
    %c2047_i32_150 = arith.constant 2047 : i32
    %155 = arith.maxsi %c0_i32_149, %154 : i32
    %156 = arith.minsi %c2047_i32_150, %155 : i32
    %c0_i32_151 = arith.constant 0 : i32
    %c0_i32_152 = arith.constant 0 : i32
    %157 = tpu.memref_slice %arg2[%156, %c0_i32_152] : memref<2048x128xf32, #tpu.memory_space<any>> -> memref<1x128xf32, #tpu.memory_space<any>>
    %c22_i32 = arith.constant 22 : i32
    %c0_i32_153 = arith.constant 0 : i32
    %158 = tpu.memref_slice %arg4[%c22_i32, %c0_i32_153] : memref<32x128xf32, #tpu.memory_space<vmem>> -> memref<1x128xf32, #tpu.memory_space<vmem>>
    %159 = tpu.memref_slice %arg5[%c0_i32_151] : memref<1x!tpu.dma_semaphore, #tpu.memory_space<semaphore_mem>> -> memref<1x!tpu.dma_semaphore, #tpu.memory_space<semaphore_mem>>
    %160 = tpu.memref_squeeze %159 : memref<1x!tpu.dma_semaphore, #tpu.memory_space<semaphore_mem>> -> memref<!tpu.dma_semaphore, #tpu.memory_space<semaphore_mem>>
    tpu.enqueue_dma source(%157 : memref<1x128xf32, #tpu.memory_space<any>>) target(%158 : memref<1x128xf32, #tpu.memory_space<vmem>>) target_semaphore(%160 : memref<!tpu.dma_semaphore, #tpu.memory_space<semaphore_mem>>)
    %c5_154 = arith.constant 5 : index
    %c3_155 = arith.constant 3 : index
    %161 = memref.load %arg1[%c5_154, %c3_155] : memref<8x4xi32, #tpu.memory_space<smem>>
    %c0_i32_156 = arith.constant 0 : i32
    %c2047_i32_157 = arith.constant 2047 : i32
    %162 = arith.maxsi %c0_i32_156, %161 : i32
    %163 = arith.minsi %c2047_i32_157, %162 : i32
    %c0_i32_158 = arith.constant 0 : i32
    %c0_i32_159 = arith.constant 0 : i32
    %164 = tpu.memref_slice %arg2[%163, %c0_i32_159] : memref<2048x128xf32, #tpu.memory_space<any>> -> memref<1x128xf32, #tpu.memory_space<any>>
    %c23_i32 = arith.constant 23 : i32
    %c0_i32_160 = arith.constant 0 : i32
    %165 = tpu.memref_slice %arg4[%c23_i32, %c0_i32_160] : memref<32x128xf32, #tpu.memory_space<vmem>> -> memref<1x128xf32, #tpu.memory_space<vmem>>
    %166 = tpu.memref_slice %arg5[%c0_i32_158] : memref<1x!tpu.dma_semaphore, #tpu.memory_space<semaphore_mem>> -> memref<1x!tpu.dma_semaphore, #tpu.memory_space<semaphore_mem>>
    %167 = tpu.memref_squeeze %166 : memref<1x!tpu.dma_semaphore, #tpu.memory_space<semaphore_mem>> -> memref<!tpu.dma_semaphore, #tpu.memory_space<semaphore_mem>>
    tpu.enqueue_dma source(%164 : memref<1x128xf32, #tpu.memory_space<any>>) target(%165 : memref<1x128xf32, #tpu.memory_space<vmem>>) target_semaphore(%167 : memref<!tpu.dma_semaphore, #tpu.memory_space<semaphore_mem>>)
    %c6 = arith.constant 6 : index
    %c0_161 = arith.constant 0 : index
    %168 = memref.load %arg1[%c6, %c0_161] : memref<8x4xi32, #tpu.memory_space<smem>>
    %c0_i32_162 = arith.constant 0 : i32
    %c2047_i32_163 = arith.constant 2047 : i32
    %169 = arith.maxsi %c0_i32_162, %168 : i32
    %170 = arith.minsi %c2047_i32_163, %169 : i32
    %c0_i32_164 = arith.constant 0 : i32
    %c0_i32_165 = arith.constant 0 : i32
    %171 = tpu.memref_slice %arg2[%170, %c0_i32_165] : memref<2048x128xf32, #tpu.memory_space<any>> -> memref<1x128xf32, #tpu.memory_space<any>>
    %c24_i32 = arith.constant 24 : i32
    %c0_i32_166 = arith.constant 0 : i32
    %172 = tpu.memref_slice %arg4[%c24_i32, %c0_i32_166] : memref<32x128xf32, #tpu.memory_space<vmem>> -> memref<1x128xf32, #tpu.memory_space<vmem>>
    %173 = tpu.memref_slice %arg5[%c0_i32_164] : memref<1x!tpu.dma_semaphore, #tpu.memory_space<semaphore_mem>> -> memref<1x!tpu.dma_semaphore, #tpu.memory_space<semaphore_mem>>
    %174 = tpu.memref_squeeze %173 : memref<1x!tpu.dma_semaphore, #tpu.memory_space<semaphore_mem>> -> memref<!tpu.dma_semaphore, #tpu.memory_space<semaphore_mem>>
    tpu.enqueue_dma source(%171 : memref<1x128xf32, #tpu.memory_space<any>>) target(%172 : memref<1x128xf32, #tpu.memory_space<vmem>>) target_semaphore(%174 : memref<!tpu.dma_semaphore, #tpu.memory_space<semaphore_mem>>)
    %c6_167 = arith.constant 6 : index
    %c1_168 = arith.constant 1 : index
    %175 = memref.load %arg1[%c6_167, %c1_168] : memref<8x4xi32, #tpu.memory_space<smem>>
    %c0_i32_169 = arith.constant 0 : i32
    %c2047_i32_170 = arith.constant 2047 : i32
    %176 = arith.maxsi %c0_i32_169, %175 : i32
    %177 = arith.minsi %c2047_i32_170, %176 : i32
    %c0_i32_171 = arith.constant 0 : i32
    %c0_i32_172 = arith.constant 0 : i32
    %178 = tpu.memref_slice %arg2[%177, %c0_i32_172] : memref<2048x128xf32, #tpu.memory_space<any>> -> memref<1x128xf32, #tpu.memory_space<any>>
    %c25_i32 = arith.constant 25 : i32
    %c0_i32_173 = arith.constant 0 : i32
    %179 = tpu.memref_slice %arg4[%c25_i32, %c0_i32_173] : memref<32x128xf32, #tpu.memory_space<vmem>> -> memref<1x128xf32, #tpu.memory_space<vmem>>
    %180 = tpu.memref_slice %arg5[%c0_i32_171] : memref<1x!tpu.dma_semaphore, #tpu.memory_space<semaphore_mem>> -> memref<1x!tpu.dma_semaphore, #tpu.memory_space<semaphore_mem>>
    %181 = tpu.memref_squeeze %180 : memref<1x!tpu.dma_semaphore, #tpu.memory_space<semaphore_mem>> -> memref<!tpu.dma_semaphore, #tpu.memory_space<semaphore_mem>>
    tpu.enqueue_dma source(%178 : memref<1x128xf32, #tpu.memory_space<any>>) target(%179 : memref<1x128xf32, #tpu.memory_space<vmem>>) target_semaphore(%181 : memref<!tpu.dma_semaphore, #tpu.memory_space<semaphore_mem>>)
    %c6_174 = arith.constant 6 : index
    %c2_175 = arith.constant 2 : index
    %182 = memref.load %arg1[%c6_174, %c2_175] : memref<8x4xi32, #tpu.memory_space<smem>>
    %c0_i32_176 = arith.constant 0 : i32
    %c2047_i32_177 = arith.constant 2047 : i32
    %183 = arith.maxsi %c0_i32_176, %182 : i32
    %184 = arith.minsi %c2047_i32_177, %183 : i32
    %c0_i32_178 = arith.constant 0 : i32
    %c0_i32_179 = arith.constant 0 : i32
    %185 = tpu.memref_slice %arg2[%184, %c0_i32_179] : memref<2048x128xf32, #tpu.memory_space<any>> -> memref<1x128xf32, #tpu.memory_space<any>>
    %c26_i32 = arith.constant 26 : i32
    %c0_i32_180 = arith.constant 0 : i32
    %186 = tpu.memref_slice %arg4[%c26_i32, %c0_i32_180] : memref<32x128xf32, #tpu.memory_space<vmem>> -> memref<1x128xf32, #tpu.memory_space<vmem>>
    %187 = tpu.memref_slice %arg5[%c0_i32_178] : memref<1x!tpu.dma_semaphore, #tpu.memory_space<semaphore_mem>> -> memref<1x!tpu.dma_semaphore, #tpu.memory_space<semaphore_mem>>
    %188 = tpu.memref_squeeze %187 : memref<1x!tpu.dma_semaphore, #tpu.memory_space<semaphore_mem>> -> memref<!tpu.dma_semaphore, #tpu.memory_space<semaphore_mem>>
    tpu.enqueue_dma source(%185 : memref<1x128xf32, #tpu.memory_space<any>>) target(%186 : memref<1x128xf32, #tpu.memory_space<vmem>>) target_semaphore(%188 : memref<!tpu.dma_semaphore, #tpu.memory_space<semaphore_mem>>)
    %c6_181 = arith.constant 6 : index
    %c3_182 = arith.constant 3 : index
    %189 = memref.load %arg1[%c6_181, %c3_182] : memref<8x4xi32, #tpu.memory_space<smem>>
    %c0_i32_183 = arith.constant 0 : i32
    %c2047_i32_184 = arith.constant 2047 : i32
    %190 = arith.maxsi %c0_i32_183, %189 : i32
    %191 = arith.minsi %c2047_i32_184, %190 : i32
    %c0_i32_185 = arith.constant 0 : i32
    %c0_i32_186 = arith.constant 0 : i32
    %192 = tpu.memref_slice %arg2[%191, %c0_i32_186] : memref<2048x128xf32, #tpu.memory_space<any>> -> memref<1x128xf32, #tpu.memory_space<any>>
    %c27_i32 = arith.constant 27 : i32
    %c0_i32_187 = arith.constant 0 : i32
    %193 = tpu.memref_slice %arg4[%c27_i32, %c0_i32_187] : memref<32x128xf32, #tpu.memory_space<vmem>> -> memref<1x128xf32, #tpu.memory_space<vmem>>
    %194 = tpu.memref_slice %arg5[%c0_i32_185] : memref<1x!tpu.dma_semaphore, #tpu.memory_space<semaphore_mem>> -> memref<1x!tpu.dma_semaphore, #tpu.memory_space<semaphore_mem>>
    %195 = tpu.memref_squeeze %194 : memref<1x!tpu.dma_semaphore, #tpu.memory_space<semaphore_mem>> -> memref<!tpu.dma_semaphore, #tpu.memory_space<semaphore_mem>>
    tpu.enqueue_dma source(%192 : memref<1x128xf32, #tpu.memory_space<any>>) target(%193 : memref<1x128xf32, #tpu.memory_space<vmem>>) target_semaphore(%195 : memref<!tpu.dma_semaphore, #tpu.memory_space<semaphore_mem>>)
    %c7 = arith.constant 7 : index
    %c0_188 = arith.constant 0 : index
    %196 = memref.load %arg1[%c7, %c0_188] : memref<8x4xi32, #tpu.memory_space<smem>>
    %c0_i32_189 = arith.constant 0 : i32
    %c2047_i32_190 = arith.constant 2047 : i32
    %197 = arith.maxsi %c0_i32_189, %196 : i32
    %198 = arith.minsi %c2047_i32_190, %197 : i32
    %c0_i32_191 = arith.constant 0 : i32
    %c0_i32_192 = arith.constant 0 : i32
    %199 = tpu.memref_slice %arg2[%198, %c0_i32_192] : memref<2048x128xf32, #tpu.memory_space<any>> -> memref<1x128xf32, #tpu.memory_space<any>>
    %c28_i32 = arith.constant 28 : i32
    %c0_i32_193 = arith.constant 0 : i32
    %200 = tpu.memref_slice %arg4[%c28_i32, %c0_i32_193] : memref<32x128xf32, #tpu.memory_space<vmem>> -> memref<1x128xf32, #tpu.memory_space<vmem>>
    %201 = tpu.memref_slice %arg5[%c0_i32_191] : memref<1x!tpu.dma_semaphore, #tpu.memory_space<semaphore_mem>> -> memref<1x!tpu.dma_semaphore, #tpu.memory_space<semaphore_mem>>
    %202 = tpu.memref_squeeze %201 : memref<1x!tpu.dma_semaphore, #tpu.memory_space<semaphore_mem>> -> memref<!tpu.dma_semaphore, #tpu.memory_space<semaphore_mem>>
    tpu.enqueue_dma source(%199 : memref<1x128xf32, #tpu.memory_space<any>>) target(%200 : memref<1x128xf32, #tpu.memory_space<vmem>>) target_semaphore(%202 : memref<!tpu.dma_semaphore, #tpu.memory_space<semaphore_mem>>)
    %c7_194 = arith.constant 7 : index
    %c1_195 = arith.constant 1 : index
    %203 = memref.load %arg1[%c7_194, %c1_195] : memref<8x4xi32, #tpu.memory_space<smem>>
    %c0_i32_196 = arith.constant 0 : i32
    %c2047_i32_197 = arith.constant 2047 : i32
    %204 = arith.maxsi %c0_i32_196, %203 : i32
    %205 = arith.minsi %c2047_i32_197, %204 : i32
    %c0_i32_198 = arith.constant 0 : i32
    %c0_i32_199 = arith.constant 0 : i32
    %206 = tpu.memref_slice %arg2[%205, %c0_i32_199] : memref<2048x128xf32, #tpu.memory_space<any>> -> memref<1x128xf32, #tpu.memory_space<any>>
    %c29_i32 = arith.constant 29 : i32
    %c0_i32_200 = arith.constant 0 : i32
    %207 = tpu.memref_slice %arg4[%c29_i32, %c0_i32_200] : memref<32x128xf32, #tpu.memory_space<vmem>> -> memref<1x128xf32, #tpu.memory_space<vmem>>
    %208 = tpu.memref_slice %arg5[%c0_i32_198] : memref<1x!tpu.dma_semaphore, #tpu.memory_space<semaphore_mem>> -> memref<1x!tpu.dma_semaphore, #tpu.memory_space<semaphore_mem>>
    %209 = tpu.memref_squeeze %208 : memref<1x!tpu.dma_semaphore, #tpu.memory_space<semaphore_mem>> -> memref<!tpu.dma_semaphore, #tpu.memory_space<semaphore_mem>>
    tpu.enqueue_dma source(%206 : memref<1x128xf32, #tpu.memory_space<any>>) target(%207 : memref<1x128xf32, #tpu.memory_space<vmem>>) target_semaphore(%209 : memref<!tpu.dma_semaphore, #tpu.memory_space<semaphore_mem>>)
    %c7_201 = arith.constant 7 : index
    %c2_202 = arith.constant 2 : index
    %210 = memref.load %arg1[%c7_201, %c2_202] : memref<8x4xi32, #tpu.memory_space<smem>>
    %c0_i32_203 = arith.constant 0 : i32
    %c2047_i32_204 = arith.constant 2047 : i32
    %211 = arith.maxsi %c0_i32_203, %210 : i32
    %212 = arith.minsi %c2047_i32_204, %211 : i32
    %c0_i32_205 = arith.constant 0 : i32
    %c0_i32_206 = arith.constant 0 : i32
    %213 = tpu.memref_slice %arg2[%212, %c0_i32_206] : memref<2048x128xf32, #tpu.memory_space<any>> -> memref<1x128xf32, #tpu.memory_space<any>>
    %c30_i32 = arith.constant 30 : i32
    %c0_i32_207 = arith.constant 0 : i32
    %214 = tpu.memref_slice %arg4[%c30_i32, %c0_i32_207] : memref<32x128xf32, #tpu.memory_space<vmem>> -> memref<1x128xf32, #tpu.memory_space<vmem>>
    %215 = tpu.memref_slice %arg5[%c0_i32_205] : memref<1x!tpu.dma_semaphore, #tpu.memory_space<semaphore_mem>> -> memref<1x!tpu.dma_semaphore, #tpu.memory_space<semaphore_mem>>
    %216 = tpu.memref_squeeze %215 : memref<1x!tpu.dma_semaphore, #tpu.memory_space<semaphore_mem>> -> memref<!tpu.dma_semaphore, #tpu.memory_space<semaphore_mem>>
    tpu.enqueue_dma source(%213 : memref<1x128xf32, #tpu.memory_space<any>>) target(%214 : memref<1x128xf32, #tpu.memory_space<vmem>>) target_semaphore(%216 : memref<!tpu.dma_semaphore, #tpu.memory_space<semaphore_mem>>)
    %c7_208 = arith.constant 7 : index
    %c3_209 = arith.constant 3 : index
    %217 = memref.load %arg1[%c7_208, %c3_209] : memref<8x4xi32, #tpu.memory_space<smem>>
    %c0_i32_210 = arith.constant 0 : i32
    %c2047_i32_211 = arith.constant 2047 : i32
    %218 = arith.maxsi %c0_i32_210, %217 : i32
    %219 = arith.minsi %c2047_i32_211, %218 : i32
    %c0_i32_212 = arith.constant 0 : i32
    %c0_i32_213 = arith.constant 0 : i32
    %220 = tpu.memref_slice %arg2[%219, %c0_i32_213] : memref<2048x128xf32, #tpu.memory_space<any>> -> memref<1x128xf32, #tpu.memory_space<any>>
    %c31_i32 = arith.constant 31 : i32
    %c0_i32_214 = arith.constant 0 : i32
    %221 = tpu.memref_slice %arg4[%c31_i32, %c0_i32_214] : memref<32x128xf32, #tpu.memory_space<vmem>> -> memref<1x128xf32, #tpu.memory_space<vmem>>
    %222 = tpu.memref_slice %arg5[%c0_i32_212] : memref<1x!tpu.dma_semaphore, #tpu.memory_space<semaphore_mem>> -> memref<1x!tpu.dma_semaphore, #tpu.memory_space<semaphore_mem>>
    %223 = tpu.memref_squeeze %222 : memref<1x!tpu.dma_semaphore, #tpu.memory_space<semaphore_mem>> -> memref<!tpu.dma_semaphore, #tpu.memory_space<semaphore_mem>>
    tpu.enqueue_dma source(%220 : memref<1x128xf32, #tpu.memory_space<any>>) target(%221 : memref<1x128xf32, #tpu.memory_space<vmem>>) target_semaphore(%223 : memref<!tpu.dma_semaphore, #tpu.memory_space<semaphore_mem>>)
    %c0_i32_215 = arith.constant 0 : i32
    %c0_i32_216 = arith.constant 0 : i32
    %224 = tpu.memref_slice %arg2[%2, %c0_i32_216] : memref<2048x128xf32, #tpu.memory_space<any>> -> memref<1x128xf32, #tpu.memory_space<any>>
    %c0_i32_217 = arith.constant 0 : i32
    %c0_i32_218 = arith.constant 0 : i32
    %225 = tpu.memref_slice %arg4[%c0_i32_217, %c0_i32_218] : memref<32x128xf32, #tpu.memory_space<vmem>> -> memref<1x128xf32, #tpu.memory_space<vmem>>
    %226 = tpu.memref_slice %arg5[%c0_i32_215] : memref<1x!tpu.dma_semaphore, #tpu.memory_space<semaphore_mem>> -> memref<1x!tpu.dma_semaphore, #tpu.memory_space<semaphore_mem>>
    %227 = tpu.memref_squeeze %226 : memref<1x!tpu.dma_semaphore, #tpu.memory_space<semaphore_mem>> -> memref<!tpu.dma_semaphore, #tpu.memory_space<semaphore_mem>>
    tpu.wait_dma2 semaphore(%227 : memref<!tpu.dma_semaphore, #tpu.memory_space<semaphore_mem>>) src(%224 : memref<1x128xf32, #tpu.memory_space<any>>) dst(%225 : memref<1x128xf32, #tpu.memory_space<vmem>>)
    %c0_i32_219 = arith.constant 0 : i32
    %c0_i32_220 = arith.constant 0 : i32
    %228 = tpu.memref_slice %arg2[%9, %c0_i32_220] : memref<2048x128xf32, #tpu.memory_space<any>> -> memref<1x128xf32, #tpu.memory_space<any>>
    %c1_i32_221 = arith.constant 1 : i32
    %c0_i32_222 = arith.constant 0 : i32
    %229 = tpu.memref_slice %arg4[%c1_i32_221, %c0_i32_222] : memref<32x128xf32, #tpu.memory_space<vmem>> -> memref<1x128xf32, #tpu.memory_space<vmem>>
    %230 = tpu.memref_slice %arg5[%c0_i32_219] : memref<1x!tpu.dma_semaphore, #tpu.memory_space<semaphore_mem>> -> memref<1x!tpu.dma_semaphore, #tpu.memory_space<semaphore_mem>>
    %231 = tpu.memref_squeeze %230 : memref<1x!tpu.dma_semaphore, #tpu.memory_space<semaphore_mem>> -> memref<!tpu.dma_semaphore, #tpu.memory_space<semaphore_mem>>
    tpu.wait_dma2 semaphore(%231 : memref<!tpu.dma_semaphore, #tpu.memory_space<semaphore_mem>>) src(%228 : memref<1x128xf32, #tpu.memory_space<any>>) dst(%229 : memref<1x128xf32, #tpu.memory_space<vmem>>)
    %c0_i32_223 = arith.constant 0 : i32
    %c0_i32_224 = arith.constant 0 : i32
    %232 = tpu.memref_slice %arg2[%16, %c0_i32_224] : memref<2048x128xf32, #tpu.memory_space<any>> -> memref<1x128xf32, #tpu.memory_space<any>>
    %c2_i32_225 = arith.constant 2 : i32
    %c0_i32_226 = arith.constant 0 : i32
    %233 = tpu.memref_slice %arg4[%c2_i32_225, %c0_i32_226] : memref<32x128xf32, #tpu.memory_space<vmem>> -> memref<1x128xf32, #tpu.memory_space<vmem>>
    %234 = tpu.memref_slice %arg5[%c0_i32_223] : memref<1x!tpu.dma_semaphore, #tpu.memory_space<semaphore_mem>> -> memref<1x!tpu.dma_semaphore, #tpu.memory_space<semaphore_mem>>
    %235 = tpu.memref_squeeze %234 : memref<1x!tpu.dma_semaphore, #tpu.memory_space<semaphore_mem>> -> memref<!tpu.dma_semaphore, #tpu.memory_space<semaphore_mem>>
    tpu.wait_dma2 semaphore(%235 : memref<!tpu.dma_semaphore, #tpu.memory_space<semaphore_mem>>) src(%232 : memref<1x128xf32, #tpu.memory_space<any>>) dst(%233 : memref<1x128xf32, #tpu.memory_space<vmem>>)
    %c0_i32_227 = arith.constant 0 : i32
    %c0_i32_228 = arith.constant 0 : i32
    %236 = tpu.memref_slice %arg2[%23, %c0_i32_228] : memref<2048x128xf32, #tpu.memory_space<any>> -> memref<1x128xf32, #tpu.memory_space<any>>
    %c3_i32_229 = arith.constant 3 : i32
    %c0_i32_230 = arith.constant 0 : i32
    %237 = tpu.memref_slice %arg4[%c3_i32_229, %c0_i32_230] : memref<32x128xf32, #tpu.memory_space<vmem>> -> memref<1x128xf32, #tpu.memory_space<vmem>>
    %238 = tpu.memref_slice %arg5[%c0_i32_227] : memref<1x!tpu.dma_semaphore, #tpu.memory_space<semaphore_mem>> -> memref<1x!tpu.dma_semaphore, #tpu.memory_space<semaphore_mem>>
    %239 = tpu.memref_squeeze %238 : memref<1x!tpu.dma_semaphore, #tpu.memory_space<semaphore_mem>> -> memref<!tpu.dma_semaphore, #tpu.memory_space<semaphore_mem>>
    tpu.wait_dma2 semaphore(%239 : memref<!tpu.dma_semaphore, #tpu.memory_space<semaphore_mem>>) src(%236 : memref<1x128xf32, #tpu.memory_space<any>>) dst(%237 : memref<1x128xf32, #tpu.memory_space<vmem>>)
    %c0_i32_231 = arith.constant 0 : i32
    %c0_i32_232 = arith.constant 0 : i32
    %240 = tpu.memref_slice %arg2[%30, %c0_i32_232] : memref<2048x128xf32, #tpu.memory_space<any>> -> memref<1x128xf32, #tpu.memory_space<any>>
    %c4_i32_233 = arith.constant 4 : i32
    %c0_i32_234 = arith.constant 0 : i32
    %241 = tpu.memref_slice %arg4[%c4_i32_233, %c0_i32_234] : memref<32x128xf32, #tpu.memory_space<vmem>> -> memref<1x128xf32, #tpu.memory_space<vmem>>
    %242 = tpu.memref_slice %arg5[%c0_i32_231] : memref<1x!tpu.dma_semaphore, #tpu.memory_space<semaphore_mem>> -> memref<1x!tpu.dma_semaphore, #tpu.memory_space<semaphore_mem>>
    %243 = tpu.memref_squeeze %242 : memref<1x!tpu.dma_semaphore, #tpu.memory_space<semaphore_mem>> -> memref<!tpu.dma_semaphore, #tpu.memory_space<semaphore_mem>>
    tpu.wait_dma2 semaphore(%243 : memref<!tpu.dma_semaphore, #tpu.memory_space<semaphore_mem>>) src(%240 : memref<1x128xf32, #tpu.memory_space<any>>) dst(%241 : memref<1x128xf32, #tpu.memory_space<vmem>>)
    %c0_i32_235 = arith.constant 0 : i32
    %c0_i32_236 = arith.constant 0 : i32
    %244 = tpu.memref_slice %arg2[%37, %c0_i32_236] : memref<2048x128xf32, #tpu.memory_space<any>> -> memref<1x128xf32, #tpu.memory_space<any>>
    %c5_i32_237 = arith.constant 5 : i32
    %c0_i32_238 = arith.constant 0 : i32
    %245 = tpu.memref_slice %arg4[%c5_i32_237, %c0_i32_238] : memref<32x128xf32, #tpu.memory_space<vmem>> -> memref<1x128xf32, #tpu.memory_space<vmem>>
    %246 = tpu.memref_slice %arg5[%c0_i32_235] : memref<1x!tpu.dma_semaphore, #tpu.memory_space<semaphore_mem>> -> memref<1x!tpu.dma_semaphore, #tpu.memory_space<semaphore_mem>>
    %247 = tpu.memref_squeeze %246 : memref<1x!tpu.dma_semaphore, #tpu.memory_space<semaphore_mem>> -> memref<!tpu.dma_semaphore, #tpu.memory_space<semaphore_mem>>
    tpu.wait_dma2 semaphore(%247 : memref<!tpu.dma_semaphore, #tpu.memory_space<semaphore_mem>>) src(%244 : memref<1x128xf32, #tpu.memory_space<any>>) dst(%245 : memref<1x128xf32, #tpu.memory_space<vmem>>)
    %c0_i32_239 = arith.constant 0 : i32
    %c0_i32_240 = arith.constant 0 : i32
    %248 = tpu.memref_slice %arg2[%44, %c0_i32_240] : memref<2048x128xf32, #tpu.memory_space<any>> -> memref<1x128xf32, #tpu.memory_space<any>>
    %c6_i32_241 = arith.constant 6 : i32
    %c0_i32_242 = arith.constant 0 : i32
    %249 = tpu.memref_slice %arg4[%c6_i32_241, %c0_i32_242] : memref<32x128xf32, #tpu.memory_space<vmem>> -> memref<1x128xf32, #tpu.memory_space<vmem>>
    %250 = tpu.memref_slice %arg5[%c0_i32_239] : memref<1x!tpu.dma_semaphore, #tpu.memory_space<semaphore_mem>> -> memref<1x!tpu.dma_semaphore, #tpu.memory_space<semaphore_mem>>
    %251 = tpu.memref_squeeze %250 : memref<1x!tpu.dma_semaphore, #tpu.memory_space<semaphore_mem>> -> memref<!tpu.dma_semaphore, #tpu.memory_space<semaphore_mem>>
    tpu.wait_dma2 semaphore(%251 : memref<!tpu.dma_semaphore, #tpu.memory_space<semaphore_mem>>) src(%248 : memref<1x128xf32, #tpu.memory_space<any>>) dst(%249 : memref<1x128xf32, #tpu.memory_space<vmem>>)
    %c0_i32_243 = arith.constant 0 : i32
    %c0_i32_244 = arith.constant 0 : i32
    %252 = tpu.memref_slice %arg2[%51, %c0_i32_244] : memref<2048x128xf32, #tpu.memory_space<any>> -> memref<1x128xf32, #tpu.memory_space<any>>
    %c7_i32_245 = arith.constant 7 : i32
    %c0_i32_246 = arith.constant 0 : i32
    %253 = tpu.memref_slice %arg4[%c7_i32_245, %c0_i32_246] : memref<32x128xf32, #tpu.memory_space<vmem>> -> memref<1x128xf32, #tpu.memory_space<vmem>>
    %254 = tpu.memref_slice %arg5[%c0_i32_243] : memref<1x!tpu.dma_semaphore, #tpu.memory_space<semaphore_mem>> -> memref<1x!tpu.dma_semaphore, #tpu.memory_space<semaphore_mem>>
    %255 = tpu.memref_squeeze %254 : memref<1x!tpu.dma_semaphore, #tpu.memory_space<semaphore_mem>> -> memref<!tpu.dma_semaphore, #tpu.memory_space<semaphore_mem>>
    tpu.wait_dma2 semaphore(%255 : memref<!tpu.dma_semaphore, #tpu.memory_space<semaphore_mem>>) src(%252 : memref<1x128xf32, #tpu.memory_space<any>>) dst(%253 : memref<1x128xf32, #tpu.memory_space<vmem>>)
    %c0_i32_247 = arith.constant 0 : i32
    %c0_i32_248 = arith.constant 0 : i32
    %256 = tpu.memref_slice %arg2[%58, %c0_i32_248] : memref<2048x128xf32, #tpu.memory_space<any>> -> memref<1x128xf32, #tpu.memory_space<any>>
    %c8_i32_249 = arith.constant 8 : i32
    %c0_i32_250 = arith.constant 0 : i32
    %257 = tpu.memref_slice %arg4[%c8_i32_249, %c0_i32_250] : memref<32x128xf32, #tpu.memory_space<vmem>> -> memref<1x128xf32, #tpu.memory_space<vmem>>
    %258 = tpu.memref_slice %arg5[%c0_i32_247] : memref<1x!tpu.dma_semaphore, #tpu.memory_space<semaphore_mem>> -> memref<1x!tpu.dma_semaphore, #tpu.memory_space<semaphore_mem>>
    %259 = tpu.memref_squeeze %258 : memref<1x!tpu.dma_semaphore, #tpu.memory_space<semaphore_mem>> -> memref<!tpu.dma_semaphore, #tpu.memory_space<semaphore_mem>>
    tpu.wait_dma2 semaphore(%259 : memref<!tpu.dma_semaphore, #tpu.memory_space<semaphore_mem>>) src(%256 : memref<1x128xf32, #tpu.memory_space<any>>) dst(%257 : memref<1x128xf32, #tpu.memory_space<vmem>>)
    %c0_i32_251 = arith.constant 0 : i32
    %c0_i32_252 = arith.constant 0 : i32
    %260 = tpu.memref_slice %arg2[%65, %c0_i32_252] : memref<2048x128xf32, #tpu.memory_space<any>> -> memref<1x128xf32, #tpu.memory_space<any>>
    %c9_i32_253 = arith.constant 9 : i32
    %c0_i32_254 = arith.constant 0 : i32
    %261 = tpu.memref_slice %arg4[%c9_i32_253, %c0_i32_254] : memref<32x128xf32, #tpu.memory_space<vmem>> -> memref<1x128xf32, #tpu.memory_space<vmem>>
    %262 = tpu.memref_slice %arg5[%c0_i32_251] : memref<1x!tpu.dma_semaphore, #tpu.memory_space<semaphore_mem>> -> memref<1x!tpu.dma_semaphore, #tpu.memory_space<semaphore_mem>>
    %263 = tpu.memref_squeeze %262 : memref<1x!tpu.dma_semaphore, #tpu.memory_space<semaphore_mem>> -> memref<!tpu.dma_semaphore, #tpu.memory_space<semaphore_mem>>
    tpu.wait_dma2 semaphore(%263 : memref<!tpu.dma_semaphore, #tpu.memory_space<semaphore_mem>>) src(%260 : memref<1x128xf32, #tpu.memory_space<any>>) dst(%261 : memref<1x128xf32, #tpu.memory_space<vmem>>)
    %c0_i32_255 = arith.constant 0 : i32
    %c0_i32_256 = arith.constant 0 : i32
    %264 = tpu.memref_slice %arg2[%72, %c0_i32_256] : memref<2048x128xf32, #tpu.memory_space<any>> -> memref<1x128xf32, #tpu.memory_space<any>>
    %c10_i32_257 = arith.constant 10 : i32
    %c0_i32_258 = arith.constant 0 : i32
    %265 = tpu.memref_slice %arg4[%c10_i32_257, %c0_i32_258] : memref<32x128xf32, #tpu.memory_space<vmem>> -> memref<1x128xf32, #tpu.memory_space<vmem>>
    %266 = tpu.memref_slice %arg5[%c0_i32_255] : memref<1x!tpu.dma_semaphore, #tpu.memory_space<semaphore_mem>> -> memref<1x!tpu.dma_semaphore, #tpu.memory_space<semaphore_mem>>
    %267 = tpu.memref_squeeze %266 : memref<1x!tpu.dma_semaphore, #tpu.memory_space<semaphore_mem>> -> memref<!tpu.dma_semaphore, #tpu.memory_space<semaphore_mem>>
    tpu.wait_dma2 semaphore(%267 : memref<!tpu.dma_semaphore, #tpu.memory_space<semaphore_mem>>) src(%264 : memref<1x128xf32, #tpu.memory_space<any>>) dst(%265 : memref<1x128xf32, #tpu.memory_space<vmem>>)
    %c0_i32_259 = arith.constant 0 : i32
    %c0_i32_260 = arith.constant 0 : i32
    %268 = tpu.memref_slice %arg2[%79, %c0_i32_260] : memref<2048x128xf32, #tpu.memory_space<any>> -> memref<1x128xf32, #tpu.memory_space<any>>
    %c11_i32_261 = arith.constant 11 : i32
    %c0_i32_262 = arith.constant 0 : i32
    %269 = tpu.memref_slice %arg4[%c11_i32_261, %c0_i32_262] : memref<32x128xf32, #tpu.memory_space<vmem>> -> memref<1x128xf32, #tpu.memory_space<vmem>>
    %270 = tpu.memref_slice %arg5[%c0_i32_259] : memref<1x!tpu.dma_semaphore, #tpu.memory_space<semaphore_mem>> -> memref<1x!tpu.dma_semaphore, #tpu.memory_space<semaphore_mem>>
    %271 = tpu.memref_squeeze %270 : memref<1x!tpu.dma_semaphore, #tpu.memory_space<semaphore_mem>> -> memref<!tpu.dma_semaphore, #tpu.memory_space<semaphore_mem>>
    tpu.wait_dma2 semaphore(%271 : memref<!tpu.dma_semaphore, #tpu.memory_space<semaphore_mem>>) src(%268 : memref<1x128xf32, #tpu.memory_space<any>>) dst(%269 : memref<1x128xf32, #tpu.memory_space<vmem>>)
    %c0_i32_263 = arith.constant 0 : i32
    %c0_i32_264 = arith.constant 0 : i32
    %272 = tpu.memref_slice %arg2[%86, %c0_i32_264] : memref<2048x128xf32, #tpu.memory_space<any>> -> memref<1x128xf32, #tpu.memory_space<any>>
    %c12_i32_265 = arith.constant 12 : i32
    %c0_i32_266 = arith.constant 0 : i32
    %273 = tpu.memref_slice %arg4[%c12_i32_265, %c0_i32_266] : memref<32x128xf32, #tpu.memory_space<vmem>> -> memref<1x128xf32, #tpu.memory_space<vmem>>
    %274 = tpu.memref_slice %arg5[%c0_i32_263] : memref<1x!tpu.dma_semaphore, #tpu.memory_space<semaphore_mem>> -> memref<1x!tpu.dma_semaphore, #tpu.memory_space<semaphore_mem>>
    %275 = tpu.memref_squeeze %274 : memref<1x!tpu.dma_semaphore, #tpu.memory_space<semaphore_mem>> -> memref<!tpu.dma_semaphore, #tpu.memory_space<semaphore_mem>>
    tpu.wait_dma2 semaphore(%275 : memref<!tpu.dma_semaphore, #tpu.memory_space<semaphore_mem>>) src(%272 : memref<1x128xf32, #tpu.memory_space<any>>) dst(%273 : memref<1x128xf32, #tpu.memory_space<vmem>>)
    %c0_i32_267 = arith.constant 0 : i32
    %c0_i32_268 = arith.constant 0 : i32
    %276 = tpu.memref_slice %arg2[%93, %c0_i32_268] : memref<2048x128xf32, #tpu.memory_space<any>> -> memref<1x128xf32, #tpu.memory_space<any>>
    %c13_i32_269 = arith.constant 13 : i32
    %c0_i32_270 = arith.constant 0 : i32
    %277 = tpu.memref_slice %arg4[%c13_i32_269, %c0_i32_270] : memref<32x128xf32, #tpu.memory_space<vmem>> -> memref<1x128xf32, #tpu.memory_space<vmem>>
    %278 = tpu.memref_slice %arg5[%c0_i32_267] : memref<1x!tpu.dma_semaphore, #tpu.memory_space<semaphore_mem>> -> memref<1x!tpu.dma_semaphore, #tpu.memory_space<semaphore_mem>>
    %279 = tpu.memref_squeeze %278 : memref<1x!tpu.dma_semaphore, #tpu.memory_space<semaphore_mem>> -> memref<!tpu.dma_semaphore, #tpu.memory_space<semaphore_mem>>
    tpu.wait_dma2 semaphore(%279 : memref<!tpu.dma_semaphore, #tpu.memory_space<semaphore_mem>>) src(%276 : memref<1x128xf32, #tpu.memory_space<any>>) dst(%277 : memref<1x128xf32, #tpu.memory_space<vmem>>)
    %c0_i32_271 = arith.constant 0 : i32
    %c0_i32_272 = arith.constant 0 : i32
    %280 = tpu.memref_slice %arg2[%100, %c0_i32_272] : memref<2048x128xf32, #tpu.memory_space<any>> -> memref<1x128xf32, #tpu.memory_space<any>>
    %c14_i32_273 = arith.constant 14 : i32
    %c0_i32_274 = arith.constant 0 : i32
    %281 = tpu.memref_slice %arg4[%c14_i32_273, %c0_i32_274] : memref<32x128xf32, #tpu.memory_space<vmem>> -> memref<1x128xf32, #tpu.memory_space<vmem>>
    %282 = tpu.memref_slice %arg5[%c0_i32_271] : memref<1x!tpu.dma_semaphore, #tpu.memory_space<semaphore_mem>> -> memref<1x!tpu.dma_semaphore, #tpu.memory_space<semaphore_mem>>
    %283 = tpu.memref_squeeze %282 : memref<1x!tpu.dma_semaphore, #tpu.memory_space<semaphore_mem>> -> memref<!tpu.dma_semaphore, #tpu.memory_space<semaphore_mem>>
    tpu.wait_dma2 semaphore(%283 : memref<!tpu.dma_semaphore, #tpu.memory_space<semaphore_mem>>) src(%280 : memref<1x128xf32, #tpu.memory_space<any>>) dst(%281 : memref<1x128xf32, #tpu.memory_space<vmem>>)
    %c0_i32_275 = arith.constant 0 : i32
    %c0_i32_276 = arith.constant 0 : i32
    %284 = tpu.memref_slice %arg2[%107, %c0_i32_276] : memref<2048x128xf32, #tpu.memory_space<any>> -> memref<1x128xf32, #tpu.memory_space<any>>
    %c15_i32_277 = arith.constant 15 : i32
    %c0_i32_278 = arith.constant 0 : i32
    %285 = tpu.memref_slice %arg4[%c15_i32_277, %c0_i32_278] : memref<32x128xf32, #tpu.memory_space<vmem>> -> memref<1x128xf32, #tpu.memory_space<vmem>>
    %286 = tpu.memref_slice %arg5[%c0_i32_275] : memref<1x!tpu.dma_semaphore, #tpu.memory_space<semaphore_mem>> -> memref<1x!tpu.dma_semaphore, #tpu.memory_space<semaphore_mem>>
    %287 = tpu.memref_squeeze %286 : memref<1x!tpu.dma_semaphore, #tpu.memory_space<semaphore_mem>> -> memref<!tpu.dma_semaphore, #tpu.memory_space<semaphore_mem>>
    tpu.wait_dma2 semaphore(%287 : memref<!tpu.dma_semaphore, #tpu.memory_space<semaphore_mem>>) src(%284 : memref<1x128xf32, #tpu.memory_space<any>>) dst(%285 : memref<1x128xf32, #tpu.memory_space<vmem>>)
    %c0_i32_279 = arith.constant 0 : i32
    %c0_i32_280 = arith.constant 0 : i32
    %288 = tpu.memref_slice %arg2[%114, %c0_i32_280] : memref<2048x128xf32, #tpu.memory_space<any>> -> memref<1x128xf32, #tpu.memory_space<any>>
    %c16_i32_281 = arith.constant 16 : i32
    %c0_i32_282 = arith.constant 0 : i32
    %289 = tpu.memref_slice %arg4[%c16_i32_281, %c0_i32_282] : memref<32x128xf32, #tpu.memory_space<vmem>> -> memref<1x128xf32, #tpu.memory_space<vmem>>
    %290 = tpu.memref_slice %arg5[%c0_i32_279] : memref<1x!tpu.dma_semaphore, #tpu.memory_space<semaphore_mem>> -> memref<1x!tpu.dma_semaphore, #tpu.memory_space<semaphore_mem>>
    %291 = tpu.memref_squeeze %290 : memref<1x!tpu.dma_semaphore, #tpu.memory_space<semaphore_mem>> -> memref<!tpu.dma_semaphore, #tpu.memory_space<semaphore_mem>>
    tpu.wait_dma2 semaphore(%291 : memref<!tpu.dma_semaphore, #tpu.memory_space<semaphore_mem>>) src(%288 : memref<1x128xf32, #tpu.memory_space<any>>) dst(%289 : memref<1x128xf32, #tpu.memory_space<vmem>>)
    %c0_i32_283 = arith.constant 0 : i32
    %c0_i32_284 = arith.constant 0 : i32
    %292 = tpu.memref_slice %arg2[%121, %c0_i32_284] : memref<2048x128xf32, #tpu.memory_space<any>> -> memref<1x128xf32, #tpu.memory_space<any>>
    %c17_i32_285 = arith.constant 17 : i32
    %c0_i32_286 = arith.constant 0 : i32
    %293 = tpu.memref_slice %arg4[%c17_i32_285, %c0_i32_286] : memref<32x128xf32, #tpu.memory_space<vmem>> -> memref<1x128xf32, #tpu.memory_space<vmem>>
    %294 = tpu.memref_slice %arg5[%c0_i32_283] : memref<1x!tpu.dma_semaphore, #tpu.memory_space<semaphore_mem>> -> memref<1x!tpu.dma_semaphore, #tpu.memory_space<semaphore_mem>>
    %295 = tpu.memref_squeeze %294 : memref<1x!tpu.dma_semaphore, #tpu.memory_space<semaphore_mem>> -> memref<!tpu.dma_semaphore, #tpu.memory_space<semaphore_mem>>
    tpu.wait_dma2 semaphore(%295 : memref<!tpu.dma_semaphore, #tpu.memory_space<semaphore_mem>>) src(%292 : memref<1x128xf32, #tpu.memory_space<any>>) dst(%293 : memref<1x128xf32, #tpu.memory_space<vmem>>)
    %c0_i32_287 = arith.constant 0 : i32
    %c0_i32_288 = arith.constant 0 : i32
    %296 = tpu.memref_slice %arg2[%128, %c0_i32_288] : memref<2048x128xf32, #tpu.memory_space<any>> -> memref<1x128xf32, #tpu.memory_space<any>>
    %c18_i32_289 = arith.constant 18 : i32
    %c0_i32_290 = arith.constant 0 : i32
    %297 = tpu.memref_slice %arg4[%c18_i32_289, %c0_i32_290] : memref<32x128xf32, #tpu.memory_space<vmem>> -> memref<1x128xf32, #tpu.memory_space<vmem>>
    %298 = tpu.memref_slice %arg5[%c0_i32_287] : memref<1x!tpu.dma_semaphore, #tpu.memory_space<semaphore_mem>> -> memref<1x!tpu.dma_semaphore, #tpu.memory_space<semaphore_mem>>
    %299 = tpu.memref_squeeze %298 : memref<1x!tpu.dma_semaphore, #tpu.memory_space<semaphore_mem>> -> memref<!tpu.dma_semaphore, #tpu.memory_space<semaphore_mem>>
    tpu.wait_dma2 semaphore(%299 : memref<!tpu.dma_semaphore, #tpu.memory_space<semaphore_mem>>) src(%296 : memref<1x128xf32, #tpu.memory_space<any>>) dst(%297 : memref<1x128xf32, #tpu.memory_space<vmem>>)
    %c0_i32_291 = arith.constant 0 : i32
    %c0_i32_292 = arith.constant 0 : i32
    %300 = tpu.memref_slice %arg2[%135, %c0_i32_292] : memref<2048x128xf32, #tpu.memory_space<any>> -> memref<1x128xf32, #tpu.memory_space<any>>
    %c19_i32_293 = arith.constant 19 : i32
    %c0_i32_294 = arith.constant 0 : i32
    %301 = tpu.memref_slice %arg4[%c19_i32_293, %c0_i32_294] : memref<32x128xf32, #tpu.memory_space<vmem>> -> memref<1x128xf32, #tpu.memory_space<vmem>>
    %302 = tpu.memref_slice %arg5[%c0_i32_291] : memref<1x!tpu.dma_semaphore, #tpu.memory_space<semaphore_mem>> -> memref<1x!tpu.dma_semaphore, #tpu.memory_space<semaphore_mem>>
    %303 = tpu.memref_squeeze %302 : memref<1x!tpu.dma_semaphore, #tpu.memory_space<semaphore_mem>> -> memref<!tpu.dma_semaphore, #tpu.memory_space<semaphore_mem>>
    tpu.wait_dma2 semaphore(%303 : memref<!tpu.dma_semaphore, #tpu.memory_space<semaphore_mem>>) src(%300 : memref<1x128xf32, #tpu.memory_space<any>>) dst(%301 : memref<1x128xf32, #tpu.memory_space<vmem>>)
    %c0_i32_295 = arith.constant 0 : i32
    %c0_i32_296 = arith.constant 0 : i32
    %304 = tpu.memref_slice %arg2[%142, %c0_i32_296] : memref<2048x128xf32, #tpu.memory_space<any>> -> memref<1x128xf32, #tpu.memory_space<any>>
    %c20_i32_297 = arith.constant 20 : i32
    %c0_i32_298 = arith.constant 0 : i32
    %305 = tpu.memref_slice %arg4[%c20_i32_297, %c0_i32_298] : memref<32x128xf32, #tpu.memory_space<vmem>> -> memref<1x128xf32, #tpu.memory_space<vmem>>
    %306 = tpu.memref_slice %arg5[%c0_i32_295] : memref<1x!tpu.dma_semaphore, #tpu.memory_space<semaphore_mem>> -> memref<1x!tpu.dma_semaphore, #tpu.memory_space<semaphore_mem>>
    %307 = tpu.memref_squeeze %306 : memref<1x!tpu.dma_semaphore, #tpu.memory_space<semaphore_mem>> -> memref<!tpu.dma_semaphore, #tpu.memory_space<semaphore_mem>>
    tpu.wait_dma2 semaphore(%307 : memref<!tpu.dma_semaphore, #tpu.memory_space<semaphore_mem>>) src(%304 : memref<1x128xf32, #tpu.memory_space<any>>) dst(%305 : memref<1x128xf32, #tpu.memory_space<vmem>>)
    %c0_i32_299 = arith.constant 0 : i32
    %c0_i32_300 = arith.constant 0 : i32
    %308 = tpu.memref_slice %arg2[%149, %c0_i32_300] : memref<2048x128xf32, #tpu.memory_space<any>> -> memref<1x128xf32, #tpu.memory_space<any>>
    %c21_i32_301 = arith.constant 21 : i32
    %c0_i32_302 = arith.constant 0 : i32
    %309 = tpu.memref_slice %arg4[%c21_i32_301, %c0_i32_302] : memref<32x128xf32, #tpu.memory_space<vmem>> -> memref<1x128xf32, #tpu.memory_space<vmem>>
    %310 = tpu.memref_slice %arg5[%c0_i32_299] : memref<1x!tpu.dma_semaphore, #tpu.memory_space<semaphore_mem>> -> memref<1x!tpu.dma_semaphore, #tpu.memory_space<semaphore_mem>>
    %311 = tpu.memref_squeeze %310 : memref<1x!tpu.dma_semaphore, #tpu.memory_space<semaphore_mem>> -> memref<!tpu.dma_semaphore, #tpu.memory_space<semaphore_mem>>
    tpu.wait_dma2 semaphore(%311 : memref<!tpu.dma_semaphore, #tpu.memory_space<semaphore_mem>>) src(%308 : memref<1x128xf32, #tpu.memory_space<any>>) dst(%309 : memref<1x128xf32, #tpu.memory_space<vmem>>)
    %c0_i32_303 = arith.constant 0 : i32
    %c0_i32_304 = arith.constant 0 : i32
    %312 = tpu.memref_slice %arg2[%156, %c0_i32_304] : memref<2048x128xf32, #tpu.memory_space<any>> -> memref<1x128xf32, #tpu.memory_space<any>>
    %c22_i32_305 = arith.constant 22 : i32
    %c0_i32_306 = arith.constant 0 : i32
    %313 = tpu.memref_slice %arg4[%c22_i32_305, %c0_i32_306] : memref<32x128xf32, #tpu.memory_space<vmem>> -> memref<1x128xf32, #tpu.memory_space<vmem>>
    %314 = tpu.memref_slice %arg5[%c0_i32_303] : memref<1x!tpu.dma_semaphore, #tpu.memory_space<semaphore_mem>> -> memref<1x!tpu.dma_semaphore, #tpu.memory_space<semaphore_mem>>
    %315 = tpu.memref_squeeze %314 : memref<1x!tpu.dma_semaphore, #tpu.memory_space<semaphore_mem>> -> memref<!tpu.dma_semaphore, #tpu.memory_space<semaphore_mem>>
    tpu.wait_dma2 semaphore(%315 : memref<!tpu.dma_semaphore, #tpu.memory_space<semaphore_mem>>) src(%312 : memref<1x128xf32, #tpu.memory_space<any>>) dst(%313 : memref<1x128xf32, #tpu.memory_space<vmem>>)
    %c0_i32_307 = arith.constant 0 : i32
    %c0_i32_308 = arith.constant 0 : i32
    %316 = tpu.memref_slice %arg2[%163, %c0_i32_308] : memref<2048x128xf32, #tpu.memory_space<any>> -> memref<1x128xf32, #tpu.memory_space<any>>
    %c23_i32_309 = arith.constant 23 : i32
    %c0_i32_310 = arith.constant 0 : i32
    %317 = tpu.memref_slice %arg4[%c23_i32_309, %c0_i32_310] : memref<32x128xf32, #tpu.memory_space<vmem>> -> memref<1x128xf32, #tpu.memory_space<vmem>>
    %318 = tpu.memref_slice %arg5[%c0_i32_307] : memref<1x!tpu.dma_semaphore, #tpu.memory_space<semaphore_mem>> -> memref<1x!tpu.dma_semaphore, #tpu.memory_space<semaphore_mem>>
    %319 = tpu.memref_squeeze %318 : memref<1x!tpu.dma_semaphore, #tpu.memory_space<semaphore_mem>> -> memref<!tpu.dma_semaphore, #tpu.memory_space<semaphore_mem>>
    tpu.wait_dma2 semaphore(%319 : memref<!tpu.dma_semaphore, #tpu.memory_space<semaphore_mem>>) src(%316 : memref<1x128xf32, #tpu.memory_space<any>>) dst(%317 : memref<1x128xf32, #tpu.memory_space<vmem>>)
    %c0_i32_311 = arith.constant 0 : i32
    %c0_i32_312 = arith.constant 0 : i32
    %320 = tpu.memref_slice %arg2[%170, %c0_i32_312] : memref<2048x128xf32, #tpu.memory_space<any>> -> memref<1x128xf32, #tpu.memory_space<any>>
    %c24_i32_313 = arith.constant 24 : i32
    %c0_i32_314 = arith.constant 0 : i32
    %321 = tpu.memref_slice %arg4[%c24_i32_313, %c0_i32_314] : memref<32x128xf32, #tpu.memory_space<vmem>> -> memref<1x128xf32, #tpu.memory_space<vmem>>
    %322 = tpu.memref_slice %arg5[%c0_i32_311] : memref<1x!tpu.dma_semaphore, #tpu.memory_space<semaphore_mem>> -> memref<1x!tpu.dma_semaphore, #tpu.memory_space<semaphore_mem>>
    %323 = tpu.memref_squeeze %322 : memref<1x!tpu.dma_semaphore, #tpu.memory_space<semaphore_mem>> -> memref<!tpu.dma_semaphore, #tpu.memory_space<semaphore_mem>>
    tpu.wait_dma2 semaphore(%323 : memref<!tpu.dma_semaphore, #tpu.memory_space<semaphore_mem>>) src(%320 : memref<1x128xf32, #tpu.memory_space<any>>) dst(%321 : memref<1x128xf32, #tpu.memory_space<vmem>>)
    %c0_i32_315 = arith.constant 0 : i32
    %c0_i32_316 = arith.constant 0 : i32
    %324 = tpu.memref_slice %arg2[%177, %c0_i32_316] : memref<2048x128xf32, #tpu.memory_space<any>> -> memref<1x128xf32, #tpu.memory_space<any>>
    %c25_i32_317 = arith.constant 25 : i32
    %c0_i32_318 = arith.constant 0 : i32
    %325 = tpu.memref_slice %arg4[%c25_i32_317, %c0_i32_318] : memref<32x128xf32, #tpu.memory_space<vmem>> -> memref<1x128xf32, #tpu.memory_space<vmem>>
    %326 = tpu.memref_slice %arg5[%c0_i32_315] : memref<1x!tpu.dma_semaphore, #tpu.memory_space<semaphore_mem>> -> memref<1x!tpu.dma_semaphore, #tpu.memory_space<semaphore_mem>>
    %327 = tpu.memref_squeeze %326 : memref<1x!tpu.dma_semaphore, #tpu.memory_space<semaphore_mem>> -> memref<!tpu.dma_semaphore, #tpu.memory_space<semaphore_mem>>
    tpu.wait_dma2 semaphore(%327 : memref<!tpu.dma_semaphore, #tpu.memory_space<semaphore_mem>>) src(%324 : memref<1x128xf32, #tpu.memory_space<any>>) dst(%325 : memref<1x128xf32, #tpu.memory_space<vmem>>)
    %c0_i32_319 = arith.constant 0 : i32
    %c0_i32_320 = arith.constant 0 : i32
    %328 = tpu.memref_slice %arg2[%184, %c0_i32_320] : memref<2048x128xf32, #tpu.memory_space<any>> -> memref<1x128xf32, #tpu.memory_space<any>>
    %c26_i32_321 = arith.constant 26 : i32
    %c0_i32_322 = arith.constant 0 : i32
    %329 = tpu.memref_slice %arg4[%c26_i32_321, %c0_i32_322] : memref<32x128xf32, #tpu.memory_space<vmem>> -> memref<1x128xf32, #tpu.memory_space<vmem>>
    %330 = tpu.memref_slice %arg5[%c0_i32_319] : memref<1x!tpu.dma_semaphore, #tpu.memory_space<semaphore_mem>> -> memref<1x!tpu.dma_semaphore, #tpu.memory_space<semaphore_mem>>
    %331 = tpu.memref_squeeze %330 : memref<1x!tpu.dma_semaphore, #tpu.memory_space<semaphore_mem>> -> memref<!tpu.dma_semaphore, #tpu.memory_space<semaphore_mem>>
    tpu.wait_dma2 semaphore(%331 : memref<!tpu.dma_semaphore, #tpu.memory_space<semaphore_mem>>) src(%328 : memref<1x128xf32, #tpu.memory_space<any>>) dst(%329 : memref<1x128xf32, #tpu.memory_space<vmem>>)
    %c0_i32_323 = arith.constant 0 : i32
    %c0_i32_324 = arith.constant 0 : i32
    %332 = tpu.memref_slice %arg2[%191, %c0_i32_324] : memref<2048x128xf32, #tpu.memory_space<any>> -> memref<1x128xf32, #tpu.memory_space<any>>
    %c27_i32_325 = arith.constant 27 : i32
    %c0_i32_326 = arith.constant 0 : i32
    %333 = tpu.memref_slice %arg4[%c27_i32_325, %c0_i32_326] : memref<32x128xf32, #tpu.memory_space<vmem>> -> memref<1x128xf32, #tpu.memory_space<vmem>>
    %334 = tpu.memref_slice %arg5[%c0_i32_323] : memref<1x!tpu.dma_semaphore, #tpu.memory_space<semaphore_mem>> -> memref<1x!tpu.dma_semaphore, #tpu.memory_space<semaphore_mem>>
    %335 = tpu.memref_squeeze %334 : memref<1x!tpu.dma_semaphore, #tpu.memory_space<semaphore_mem>> -> memref<!tpu.dma_semaphore, #tpu.memory_space<semaphore_mem>>
    tpu.wait_dma2 semaphore(%335 : memref<!tpu.dma_semaphore, #tpu.memory_space<semaphore_mem>>) src(%332 : memref<1x128xf32, #tpu.memory_space<any>>) dst(%333 : memref<1x128xf32, #tpu.memory_space<vmem>>)
    %c0_i32_327 = arith.constant 0 : i32
    %c0_i32_328 = arith.constant 0 : i32
    %336 = tpu.memref_slice %arg2[%198, %c0_i32_328] : memref<2048x128xf32, #tpu.memory_space<any>> -> memref<1x128xf32, #tpu.memory_space<any>>
    %c28_i32_329 = arith.constant 28 : i32
    %c0_i32_330 = arith.constant 0 : i32
    %337 = tpu.memref_slice %arg4[%c28_i32_329, %c0_i32_330] : memref<32x128xf32, #tpu.memory_space<vmem>> -> memref<1x128xf32, #tpu.memory_space<vmem>>
    %338 = tpu.memref_slice %arg5[%c0_i32_327] : memref<1x!tpu.dma_semaphore, #tpu.memory_space<semaphore_mem>> -> memref<1x!tpu.dma_semaphore, #tpu.memory_space<semaphore_mem>>
    %339 = tpu.memref_squeeze %338 : memref<1x!tpu.dma_semaphore, #tpu.memory_space<semaphore_mem>> -> memref<!tpu.dma_semaphore, #tpu.memory_space<semaphore_mem>>
    tpu.wait_dma2 semaphore(%339 : memref<!tpu.dma_semaphore, #tpu.memory_space<semaphore_mem>>) src(%336 : memref<1x128xf32, #tpu.memory_space<any>>) dst(%337 : memref<1x128xf32, #tpu.memory_space<vmem>>)
    %c0_i32_331 = arith.constant 0 : i32
    %c0_i32_332 = arith.constant 0 : i32
    %340 = tpu.memref_slice %arg2[%205, %c0_i32_332] : memref<2048x128xf32, #tpu.memory_space<any>> -> memref<1x128xf32, #tpu.memory_space<any>>
    %c29_i32_333 = arith.constant 29 : i32
    %c0_i32_334 = arith.constant 0 : i32
    %341 = tpu.memref_slice %arg4[%c29_i32_333, %c0_i32_334] : memref<32x128xf32, #tpu.memory_space<vmem>> -> memref<1x128xf32, #tpu.memory_space<vmem>>
    %342 = tpu.memref_slice %arg5[%c0_i32_331] : memref<1x!tpu.dma_semaphore, #tpu.memory_space<semaphore_mem>> -> memref<1x!tpu.dma_semaphore, #tpu.memory_space<semaphore_mem>>
    %343 = tpu.memref_squeeze %342 : memref<1x!tpu.dma_semaphore, #tpu.memory_space<semaphore_mem>> -> memref<!tpu.dma_semaphore, #tpu.memory_space<semaphore_mem>>
    tpu.wait_dma2 semaphore(%343 : memref<!tpu.dma_semaphore, #tpu.memory_space<semaphore_mem>>) src(%340 : memref<1x128xf32, #tpu.memory_space<any>>) dst(%341 : memref<1x128xf32, #tpu.memory_space<vmem>>)
    %c0_i32_335 = arith.constant 0 : i32
    %c0_i32_336 = arith.constant 0 : i32
    %344 = tpu.memref_slice %arg2[%212, %c0_i32_336] : memref<2048x128xf32, #tpu.memory_space<any>> -> memref<1x128xf32, #tpu.memory_space<any>>
    %c30_i32_337 = arith.constant 30 : i32
    %c0_i32_338 = arith.constant 0 : i32
    %345 = tpu.memref_slice %arg4[%c30_i32_337, %c0_i32_338] : memref<32x128xf32, #tpu.memory_space<vmem>> -> memref<1x128xf32, #tpu.memory_space<vmem>>
    %346 = tpu.memref_slice %arg5[%c0_i32_335] : memref<1x!tpu.dma_semaphore, #tpu.memory_space<semaphore_mem>> -> memref<1x!tpu.dma_semaphore, #tpu.memory_space<semaphore_mem>>
    %347 = tpu.memref_squeeze %346 : memref<1x!tpu.dma_semaphore, #tpu.memory_space<semaphore_mem>> -> memref<!tpu.dma_semaphore, #tpu.memory_space<semaphore_mem>>
    tpu.wait_dma2 semaphore(%347 : memref<!tpu.dma_semaphore, #tpu.memory_space<semaphore_mem>>) src(%344 : memref<1x128xf32, #tpu.memory_space<any>>) dst(%345 : memref<1x128xf32, #tpu.memory_space<vmem>>)
    %c0_i32_339 = arith.constant 0 : i32
    %c0_i32_340 = arith.constant 0 : i32
    %348 = tpu.memref_slice %arg2[%219, %c0_i32_340] : memref<2048x128xf32, #tpu.memory_space<any>> -> memref<1x128xf32, #tpu.memory_space<any>>
    %c31_i32_341 = arith.constant 31 : i32
    %c0_i32_342 = arith.constant 0 : i32
    %349 = tpu.memref_slice %arg4[%c31_i32_341, %c0_i32_342] : memref<32x128xf32, #tpu.memory_space<vmem>> -> memref<1x128xf32, #tpu.memory_space<vmem>>
    %350 = tpu.memref_slice %arg5[%c0_i32_339] : memref<1x!tpu.dma_semaphore, #tpu.memory_space<semaphore_mem>> -> memref<1x!tpu.dma_semaphore, #tpu.memory_space<semaphore_mem>>
    %351 = tpu.memref_squeeze %350 : memref<1x!tpu.dma_semaphore, #tpu.memory_space<semaphore_mem>> -> memref<!tpu.dma_semaphore, #tpu.memory_space<semaphore_mem>>
    tpu.wait_dma2 semaphore(%351 : memref<!tpu.dma_semaphore, #tpu.memory_space<semaphore_mem>>) src(%348 : memref<1x128xf32, #tpu.memory_space<any>>) dst(%349 : memref<1x128xf32, #tpu.memory_space<vmem>>)
    %c0_343 = arith.constant 0 : index
    %c0_344 = arith.constant 0 : index
    %352 = vector.load %arg4[%c0_343, %c0_344] : memref<32x128xf32, #tpu.memory_space<vmem>>, vector<4x128xf32>
    %cst = arith.constant dense<0.000000e+00> : vector<128xf32>
    %353 = vector.multi_reduction <add>, %352, %cst [0] : vector<4x128xf32> to vector<128xf32>
    %354 = vector.shape_cast %353 : vector<128xf32> to vector<1x128xf32>
    %cst_345 = arith.constant 2.500000e-01 : f32
    %355 = vector.broadcast %cst_345 : f32 to vector<1x128xf32>
    %356 = arith.mulf %354, %355 : vector<1x128xf32>
    %357 = arith.truncf %356 : vector<1x128xf32> to vector<1x128xbf16>
    %c0_346 = arith.constant 0 : index
    %c0_347 = arith.constant 0 : index
    %358 = vector.load %arg3[%c0_346, %c0_347] : memref<8x128xbf16, #tpu.memory_space<vmem>>, vector<1x128xbf16>
    tpu.vector_store %arg3[%c0_346, %c0_347], %357 {strides = array<i32>} : memref<8x128xbf16, #tpu.memory_space<vmem>>, vector<1x128xbf16>,
    %c4_348 = arith.constant 4 : index
    %c0_349 = arith.constant 0 : index
    %359 = vector.load %arg4[%c4_348, %c0_349] : memref<32x128xf32, #tpu.memory_space<vmem>>, vector<4x128xf32>
    %cst_350 = arith.constant dense<0.000000e+00> : vector<128xf32>
    %360 = vector.multi_reduction <add>, %359, %cst_350 [0] : vector<4x128xf32> to vector<128xf32>
    %361 = vector.shape_cast %360 : vector<128xf32> to vector<1x128xf32>
    %cst_351 = arith.constant 2.500000e-01 : f32
    %362 = vector.broadcast %cst_351 : f32 to vector<1x128xf32>
    %363 = arith.mulf %361, %362 : vector<1x128xf32>
    %364 = arith.truncf %363 : vector<1x128xf32> to vector<1x128xbf16>
    %c1_352 = arith.constant 1 : index
    %c0_353 = arith.constant 0 : index
    %365 = vector.load %arg3[%c1_352, %c0_353] : memref<8x128xbf16, #tpu.memory_space<vmem>>, vector<1x128xbf16>
    tpu.vector_store %arg3[%c1_352, %c0_353], %364 {strides = array<i32>} : memref<8x128xbf16, #tpu.memory_space<vmem>>, vector<1x128xbf16>,
    %c8 = arith.constant 8 : index
    %c0_354 = arith.constant 0 : index
    %366 = vector.load %arg4[%c8, %c0_354] : memref<32x128xf32, #tpu.memory_space<vmem>>, vector<4x128xf32>
    %cst_355 = arith.constant dense<0.000000e+00> : vector<128xf32>
    %367 = vector.multi_reduction <add>, %366, %cst_355 [0] : vector<4x128xf32> to vector<128xf32>
    %368 = vector.shape_cast %367 : vector<128xf32> to vector<1x128xf32>
    %cst_356 = arith.constant 2.500000e-01 : f32
    %369 = vector.broadcast %cst_356 : f32 to vector<1x128xf32>
    %370 = arith.mulf %368, %369 : vector<1x128xf32>
    %371 = arith.truncf %370 : vector<1x128xf32> to vector<1x128xbf16>
    %c2_357 = arith.constant 2 : index
    %c0_358 = arith.constant 0 : index
    %372 = vector.load %arg3[%c2_357, %c0_358] : memref<8x128xbf16, #tpu.memory_space<vmem>>, vector<1x128xbf16>
    tpu.vector_store %arg3[%c2_357, %c0_358], %371 {strides = array<i32>} : memref<8x128xbf16, #tpu.memory_space<vmem>>, vector<1x128xbf16>,
    %c12 = arith.constant 12 : index
    %c0_359 = arith.constant 0 : index
    %373 = vector.load %arg4[%c12, %c0_359] : memref<32x128xf32, #tpu.memory_space<vmem>>, vector<4x128xf32>
    %cst_360 = arith.constant dense<0.000000e+00> : vector<128xf32>
    %374 = vector.multi_reduction <add>, %373, %cst_360 [0] : vector<4x128xf32> to vector<128xf32>
    %375 = vector.shape_cast %374 : vector<128xf32> to vector<1x128xf32>
    %cst_361 = arith.constant 2.500000e-01 : f32
    %376 = vector.broadcast %cst_361 : f32 to vector<1x128xf32>
    %377 = arith.mulf %375, %376 : vector<1x128xf32>
    %378 = arith.truncf %377 : vector<1x128xf32> to vector<1x128xbf16>
    %c3_362 = arith.constant 3 : index
    %c0_363 = arith.constant 0 : index
    %379 = vector.load %arg3[%c3_362, %c0_363] : memref<8x128xbf16, #tpu.memory_space<vmem>>, vector<1x128xbf16>
    tpu.vector_store %arg3[%c3_362, %c0_363], %378 {strides = array<i32>} : memref<8x128xbf16, #tpu.memory_space<vmem>>, vector<1x128xbf16>,
    %c16 = arith.constant 16 : index
    %c0_364 = arith.constant 0 : index
    %380 = vector.load %arg4[%c16, %c0_364] : memref<32x128xf32, #tpu.memory_space<vmem>>, vector<4x128xf32>
    %cst_365 = arith.constant dense<0.000000e+00> : vector<128xf32>
    %381 = vector.multi_reduction <add>, %380, %cst_365 [0] : vector<4x128xf32> to vector<128xf32>
    %382 = vector.shape_cast %381 : vector<128xf32> to vector<1x128xf32>
    %cst_366 = arith.constant 2.500000e-01 : f32
    %383 = vector.broadcast %cst_366 : f32 to vector<1x128xf32>
    %384 = arith.mulf %382, %383 : vector<1x128xf32>
    %385 = arith.truncf %384 : vector<1x128xf32> to vector<1x128xbf16>
    %c4_367 = arith.constant 4 : index
    %c0_368 = arith.constant 0 : index
    %386 = vector.load %arg3[%c4_367, %c0_368] : memref<8x128xbf16, #tpu.memory_space<vmem>>, vector<1x128xbf16>
    tpu.vector_store %arg3[%c4_367, %c0_368], %385 {strides = array<i32>} : memref<8x128xbf16, #tpu.memory_space<vmem>>, vector<1x128xbf16>,
    %c20 = arith.constant 20 : index
    %c0_369 = arith.constant 0 : index
    %387 = vector.load %arg4[%c20, %c0_369] : memref<32x128xf32, #tpu.memory_space<vmem>>, vector<4x128xf32>
    %cst_370 = arith.constant dense<0.000000e+00> : vector<128xf32>
    %388 = vector.multi_reduction <add>, %387, %cst_370 [0] : vector<4x128xf32> to vector<128xf32>
    %389 = vector.shape_cast %388 : vector<128xf32> to vector<1x128xf32>
    %cst_371 = arith.constant 2.500000e-01 : f32
    %390 = vector.broadcast %cst_371 : f32 to vector<1x128xf32>
    %391 = arith.mulf %389, %390 : vector<1x128xf32>
    %392 = arith.truncf %391 : vector<1x128xf32> to vector<1x128xbf16>
    %c5_372 = arith.constant 5 : index
    %c0_373 = arith.constant 0 : index
    %393 = vector.load %arg3[%c5_372, %c0_373] : memref<8x128xbf16, #tpu.memory_space<vmem>>, vector<1x128xbf16>
    tpu.vector_store %arg3[%c5_372, %c0_373], %392 {strides = array<i32>} : memref<8x128xbf16, #tpu.memory_space<vmem>>, vector<1x128xbf16>,
    %c24 = arith.constant 24 : index
    %c0_374 = arith.constant 0 : index
    %394 = vector.load %arg4[%c24, %c0_374] : memref<32x128xf32, #tpu.memory_space<vmem>>, vector<4x128xf32>
    %cst_375 = arith.constant dense<0.000000e+00> : vector<128xf32>
    %395 = vector.multi_reduction <add>, %394, %cst_375 [0] : vector<4x128xf32> to vector<128xf32>
    %396 = vector.shape_cast %395 : vector<128xf32> to vector<1x128xf32>
    %cst_376 = arith.constant 2.500000e-01 : f32
    %397 = vector.broadcast %cst_376 : f32 to vector<1x128xf32>
    %398 = arith.mulf %396, %397 : vector<1x128xf32>
    %399 = arith.truncf %398 : vector<1x128xf32> to vector<1x128xbf16>
    %c6_377 = arith.constant 6 : index
    %c0_378 = arith.constant 0 : index
    %400 = vector.load %arg3[%c6_377, %c0_378] : memref<8x128xbf16, #tpu.memory_space<vmem>>, vector<1x128xbf16>
    tpu.vector_store %arg3[%c6_377, %c0_378], %399 {strides = array<i32>} : memref<8x128xbf16, #tpu.memory_space<vmem>>, vector<1x128xbf16>,
    %c28 = arith.constant 28 : index
    %c0_379 = arith.constant 0 : index
    %401 = vector.load %arg4[%c28, %c0_379] : memref<32x128xf32, #tpu.memory_space<vmem>>, vector<4x128xf32>
    %cst_380 = arith.constant dense<0.000000e+00> : vector<128xf32>
    %402 = vector.multi_reduction <add>, %401, %cst_380 [0] : vector<4x128xf32> to vector<128xf32>
    %403 = vector.shape_cast %402 : vector<128xf32> to vector<1x128xf32>
    %cst_381 = arith.constant 2.500000e-01 : f32
    %404 = vector.broadcast %cst_381 : f32 to vector<1x128xf32>
    %405 = arith.mulf %403, %404 : vector<1x128xf32>
    %406 = arith.truncf %405 : vector<1x128xf32> to vector<1x128xbf16>
    %c7_382 = arith.constant 7 : index
    %c0_383 = arith.constant 0 : index
    %407 = vector.load %arg3[%c7_382, %c0_383] : memref<8x128xbf16, #tpu.memory_space<vmem>>, vector<1x128xbf16>
    tpu.vector_store %arg3[%c7_382, %c0_383], %406 {strides = array<i32>} : memref<8x128xbf16, #tpu.memory_space<vmem>>, vector<1x128xbf16>,
    return
  }
  func.func @transform_1(%arg0: i32, %arg1: memref<8x4xi32, #tpu.memory_space<smem>>) -> (i32, i32) {
    %c0_i32 = arith.constant 0 : i32
    %c0_i32_0 = arith.constant 0 : i32
    %c0_i32_1 = arith.constant 0 : i32
    return %c0_i32, %c0_i32_0 : i32, i32
  }
}

</mosaic_0001>

<llo_original>
// kernel: tpu_custom_call.1
$region0: #{tpu_custom_call.1}
  #allocation0 [shape = 'u32[]', space=smem, size = 0x4, offset = 0x4, fixed_abs, tag = 'smem constant byte address 0x4 - core index']
  #allocation1 [shape = 'u32[72,128]{1,0:T(1,128)}', space=vmem, size = 0x9000, scoped, tag = 'internal scratch']
  #allocation2 [shape = 'f32[32,128]{1,0:T(8,128)}', space=vmem, size = 0x4000, scoped, tag = 'scratch operand']
  #allocation3 [shape = 's32[1]{0}', space=sflag, size = 0x4, scoped, tag = 'scratch operand']
  #allocation4 [shape = 's32[1]{0}', space=sflag, size = 0x4, scoped, tag = 'scoped memory for tpu_custom_call.1']
  #allocation5 [shape = 'u8[4096]{0}', space=smem, size = 0x1000, scoped, tag = 'prefetched SMEM operand 0']
  #allocation8 [shape = 's32[]', space=sflag, size = 0x4, offset = 0, fixed_abs, tag = 'sflag constant byte address 0x0 - dummy sync flag']
  #allocation9 [shape = 's32[]', space=sflag, size = 0x4, offset = 0, fixed_abs, tag = 'sflag constant byte address 0x0 - dummy sync flag']
  #allocation10 [shape = 'u32[]', space=smem, size = 0x4, offset = 0x44, fixed_abs, tag = 'smem constant byte address 0x44 - assertion arg 0']
  #allocation11 [shape = 'u32[]', space=smem, size = 0x4, offset = 0x48, fixed_abs, tag = 'smem constant byte address 0x48 - assertion arg 1']
  #allocation12 [shape = 's32[]', space=sflag, size = 0x4, offset = 0, fixed_abs, tag = 'sflag constant byte address 0x0 - dummy sync flag']
  #allocation13 [shape = 's32[]', space=sflag, size = 0x4, offset = 0, fixed_abs, tag = 'sflag constant byte address 0x0 - dummy sync flag']
  #allocation14 [shape = 's32[]', space=sflag, size = 0x4, offset = 0, fixed_abs, tag = 'sflag constant byte address 0x0 - dummy sync flag']
  #allocation15 [shape = 's32[]', space=sflag, size = 0x4, offset = 0, fixed_abs, tag = 'sflag constant byte address 0x0 - dummy sync flag']
  #allocation16 [shape = 's32[]', space=sflag, size = 0x4, offset = 0, fixed_abs, tag = 'sflag constant byte address 0x0 - dummy sync flag']
  #allocation17 [shape = 's32[]', space=sflag, size = 0x4, offset = 0, fixed_abs, tag = 'sflag constant byte address 0x0 - dummy sync flag']
  #allocation18 [shape = 's32[]', space=sflag, size = 0x4, offset = 0, fixed_abs, tag = 'sflag constant byte address 0x0 - dummy sync flag']
  #allocation19 [shape = 's32[]', space=sflag, size = 0x4, offset = 0, fixed_abs, tag = 'sflag constant byte address 0x0 - dummy sync flag']
  #allocation20 [shape = 's32[]', space=sflag, size = 0x4, offset = 0, fixed_abs, tag = 'sflag constant byte address 0x0 - dummy sync flag']
  #allocation21 [shape = 's32[]', space=sflag, size = 0x4, offset = 0, fixed_abs, tag = 'sflag constant byte address 0x0 - dummy sync flag']
  #allocation22 [shape = 's32[]', space=sflag, size = 0x4, offset = 0, fixed_abs, tag = 'sflag constant byte address 0x0 - dummy sync flag']
  #allocation23 [shape = 's32[]', space=sflag, size = 0x4, offset = 0, fixed_abs, tag = 'sflag constant byte address 0x0 - dummy sync flag']
  #allocation24 [shape = 's32[]', space=sflag, size = 0x4, offset = 0, fixed_abs, tag = 'sflag constant byte address 0x0 - dummy sync flag']
  #allocation25 [shape = 's32[]', space=sflag, size = 0x4, offset = 0, fixed_abs, tag = 'sflag constant byte address 0x0 - dummy sync flag']
  #allocation26 [shape = 's32[]', space=sflag, size = 0x4, offset = 0, fixed_abs, tag = 'sflag constant byte address 0x0 - dummy sync flag']
  #allocation27 [shape = 's32[]', space=sflag, size = 0x4, offset = 0, fixed_abs, tag = 'sflag constant byte address 0x0 - dummy sync flag']
  #allocation28 [shape = 's32[]', space=sflag, size = 0x4, offset = 0, fixed_abs, tag = 'sflag constant byte address 0x0 - dummy sync flag']
  #allocation29 [shape = 's32[]', space=sflag, size = 0x4, offset = 0, fixed_abs, tag = 'sflag constant byte address 0x0 - dummy sync flag']
  #allocation30 [shape = 's32[]', space=sflag, size = 0x4, offset = 0, fixed_abs, tag = 'sflag constant byte address 0x0 - dummy sync flag']
  #allocation31 [shape = 's32[]', space=sflag, size = 0x4, offset = 0, fixed_abs, tag = 'sflag constant byte address 0x0 - dummy sync flag']
  #allocation32 [shape = 's32[]', space=sflag, size = 0x4, offset = 0, fixed_abs, tag = 'sflag constant byte address 0x0 - dummy sync flag']
  #allocation33 [shape = 's32[]', space=sflag, size = 0x4, offset = 0, fixed_abs, tag = 'sflag constant byte address 0x0 - dummy sync flag']
  #allocation34 [shape = 's32[]', space=sflag, size = 0x4, offset = 0, fixed_abs, tag = 'sflag constant byte address 0x0 - dummy sync flag']
  #allocation35 [shape = 's32[]', space=sflag, size = 0x4, offset = 0, fixed_abs, tag = 'sflag constant byte address 0x0 - dummy sync flag']
  #allocation36 [shape = 's32[]', space=sflag, size = 0x4, offset = 0, fixed_abs, tag = 'sflag constant byte address 0x0 - dummy sync flag']
  #allocation37 [shape = 's32[]', space=sflag, size = 0x4, offset = 0, fixed_abs, tag = 'sflag constant byte address 0x0 - dummy sync flag']
  #allocation38 [shape = 's32[]', space=sflag, size = 0x4, offset = 0, fixed_abs, tag = 'sflag constant byte address 0x0 - dummy sync flag']
  #allocation39 [shape = 's32[]', space=sflag, size = 0x4, offset = 0, fixed_abs, tag = 'sflag constant byte address 0x0 - dummy sync flag']
  #allocation40 [shape = 's32[]', space=sflag, size = 0x4, offset = 0, fixed_abs, tag = 'sflag constant byte address 0x0 - dummy sync flag']
  #allocation41 [shape = 's32[]', space=sflag, size = 0x4, offset = 0, fixed_abs, tag = 'sflag constant byte address 0x0 - dummy sync flag']
  #allocation42 [shape = 's32[]', space=sflag, size = 0x4, offset = 0, fixed_abs, tag = 'sflag constant byte address 0x0 - dummy sync flag']
  #allocation43 [shape = 's32[]', space=sflag, size = 0x4, offset = 0, fixed_abs, tag = 'sflag constant byte address 0x0 - dummy sync flag']
  #allocation44 [shape = 's32[]', space=sflag, size = 0x4, offset = 0, fixed_abs, tag = 'sflag constant byte address 0x0 - dummy sync flag']
  #allocation45 [shape = 's32[]', space=sflag, size = 0x4, offset = 0, fixed_abs, tag = 'sflag constant byte address 0x0 - dummy sync flag']
  #allocation46 [shape = 's32[]', space=sflag, size = 0x4, offset = 0, fixed_abs, tag = 'sflag constant byte address 0x0 - dummy sync flag']
  #allocation47 [shape = 's32[]', space=sflag, size = 0x4, offset = 0, fixed_abs, tag = 'sflag constant byte address 0x0 - dummy sync flag']
  #allocation48 [shape = 's32[]', space=sflag, size = 0x4, offset = 0, fixed_abs, tag = 'sflag constant byte address 0x0 - dummy sync flag']
  #allocation49 [shape = 's32[]', space=sflag, size = 0x4, offset = 0, fixed_abs, tag = 'sflag constant byte address 0x0 - dummy sync flag']
  #allocation50 [shape = 's32[]', space=sflag, size = 0x4, offset = 0, fixed_abs, tag = 'sflag constant byte address 0x0 - dummy sync flag']
  #allocation51 [shape = 's32[]', space=sflag, size = 0x4, offset = 0, fixed_abs, tag = 'sflag constant byte address 0x0 - dummy sync flag']
  #allocation52 [shape = 's32[]', space=sflag, size = 0x4, offset = 0, fixed_abs, tag = 'sflag constant byte address 0x0 - dummy sync flag']
  #allocation53 [shape = 's32[]', space=sflag, size = 0x4, offset = 0, fixed_abs, tag = 'sflag constant byte address 0x0 - dummy sync flag']
  #allocation54 [shape = 's32[]', space=sflag, size = 0x4, offset = 0, fixed_abs, tag = 'sflag constant byte address 0x0 - dummy sync flag']
  #allocation55 [shape = 's32[]', space=sflag, size = 0x4, offset = 0, fixed_abs, tag = 'sflag constant byte address 0x0 - dummy sync flag']
  #allocation56 [shape = 's32[]', space=sflag, size = 0x4, offset = 0, fixed_abs, tag = 'sflag constant byte address 0x0 - dummy sync flag']
  #allocation57 [shape = 's32[]', space=sflag, size = 0x4, offset = 0, fixed_abs, tag = 'sflag constant byte address 0x0 - dummy sync flag']
  #allocation58 [shape = 's32[]', space=sflag, size = 0x4, offset = 0, fixed_abs, tag = 'sflag constant byte address 0x0 - dummy sync flag']
  #allocation59 [shape = 's32[]', space=sflag, size = 0x4, offset = 0, fixed_abs, tag = 'sflag constant byte address 0x0 - dummy sync flag']
  #allocation60 [shape = 's32[]', space=sflag, size = 0x4, offset = 0, fixed_abs, tag = 'sflag constant byte address 0x0 - dummy sync flag']
  #allocation61 [shape = 's32[]', space=sflag, size = 0x4, offset = 0, fixed_abs, tag = 'sflag constant byte address 0x0 - dummy sync flag']
  #allocation62 [shape = 's32[]', space=sflag, size = 0x4, offset = 0, fixed_abs, tag = 'sflag constant byte address 0x0 - dummy sync flag']
  #allocation63 [shape = 's32[]', space=sflag, size = 0x4, offset = 0, fixed_abs, tag = 'sflag constant byte address 0x0 - dummy sync flag']
  #allocation64 [shape = 's32[]', space=sflag, size = 0x4, offset = 0, fixed_abs, tag = 'sflag constant byte address 0x0 - dummy sync flag']
  #allocation65 [shape = 's32[]', space=sflag, size = 0x4, offset = 0, fixed_abs, tag = 'sflag constant byte address 0x0 - dummy sync flag']
  #allocation66 [shape = 's32[]', space=sflag, size = 0x4, offset = 0, fixed_abs, tag = 'sflag constant byte address 0x0 - dummy sync flag']
  #allocation67 [shape = 's32[]', space=sflag, size = 0x4, offset = 0, fixed_abs, tag = 'sflag constant byte address 0x0 - dummy sync flag']
  #allocation68 [shape = 's32[]', space=sflag, size = 0x4, offset = 0, fixed_abs, tag = 'sflag constant byte address 0x0 - dummy sync flag']
  #allocation69 [shape = 's32[]', space=sflag, size = 0x4, offset = 0, fixed_abs, tag = 'sflag constant byte address 0x0 - dummy sync flag']
  #allocation70 [shape = 's32[]', space=sflag, size = 0x4, offset = 0, fixed_abs, tag = 'sflag constant byte address 0x0 - dummy sync flag']
  #allocation71 [shape = 's32[]', space=sflag, size = 0x4, offset = 0, fixed_abs, tag = 'sflag constant byte address 0x0 - dummy sync flag']
  #allocation72 [shape = 's32[]', space=sflag, size = 0x4, offset = 0, fixed_abs, tag = 'sflag constant byte address 0x0 - dummy sync flag']
  #allocation73 [shape = 's32[]', space=sflag, size = 0x4, offset = 0, fixed_abs, tag = 'sflag constant byte address 0x0 - dummy sync flag']
  %s0 = inlined_call_operand.vmem [shape: s32[8,4], index: 0, kind: input, shape index: {}]
  %s1 = inlined_call_operand.hbm [shape: f32[2048,128], index: 1, kind: input, shape index: {}]
  %s2 = inlined_call_operand.hbm [shape: bf16[8,128], index: 2, kind: output, shape index: {}]
  %s3 = sld [smem:[#allocation0]]
  $region138: #{tpu_custom_call.1} parent=0
    _
  %s5 = ssub.s32 1, %s3
  %s6 = scalar_select 0, %s5, %s3
  %s8 = sshll.u32 %s0, 4
  %s9 = int_to_ptr.vmem [resolvable:$true] %s8
  %11 = dma.vmem_to_smem %s9, 128, [#allocation5], [#allocation4]
  %13 = dma.done [#allocation4], 128
  %14 = sfence
  $region1: #{tpu_custom_call.1} parent=0
    #allocation6 [shape = 'u8[2048]{0}', space=vmem, size = 0x800, scoped, tag = 'output window, operand 0, single buffered']
    #allocation7 [shape = 's32[1]{0}', space=sflag, size = 0x4, scoped, tag = 'scoped memory for tpu_custom_call.1']
    %15 = vsyncpa [#allocation7], 0
    %s16 = sld [smem:[#allocation5]]
    %p17 = scmp.gt.s32.totalorder %s16, 0
    %s18 = scalar_select %p17, %s16, 0
    %p19 = scmp.lt.s32.totalorder %s18, 2047
    %s20 = scalar_select %p19, %s18, 2047
    %s21 = scalar_lea.hbm %s1, %s20
    // Predicated region
    $region2: #{tpu_custom_call.1} parent=1 // pred_check
      _
    $region3: #{tpu_custom_call.1} parent=1 // pred_check_branch
      %23 = sbr.rel target = $region5
    $region4: #{tpu_custom_call.1} parent=1 // pred_region
      %24 = sst [smem:[#allocation10]] [#allocation9]
      %25 = sst [smem:[#allocation11]] [#allocation8]
    $region5: #{tpu_custom_call.1} parent=1 // pred_fallthru
      _
    %27 = shalt.err (0)
    %s29 = sshll.u32 %s21, 4
    %s30 = int_to_ptr.hbm [resolvable:$true] %s29
    %s31 = sshll.u32 [#allocation2], 4
    %s32 = int_to_ptr.vmem [resolvable:$true] %s31
    %34 = dma.hbm_to_vmem [thread:$0]  %s30, 16, %s32, [#allocation3]
    %s35 = sld [smem:[#allocation5 + $0x1]]
    %p36 = scmp.gt.s32.totalorder %s35, 0
    %s37 = scalar_select %p36, %s35, 0
    %p38 = scmp.lt.s32.totalorder %s37, 2047
    %s39 = scalar_select %p38, %s37, 2047
    %s40 = scalar_lea.hbm %s1, %s39
    %s41 = scalar_lea.vmem [#allocation2], 1
    // Predicated region
    $region6: #{tpu_custom_call.1} parent=1 // pred_check
      _
    $region7: #{tpu_custom_call.1} parent=1 // pred_check_branch
      %43 = sbr.rel target = $region9
    $region8: #{tpu_custom_call.1} parent=1 // pred_region
      %44 = sst [smem:[#allocation10]] [#allocation13]
      %45 = sst [smem:[#allocation11]] [#allocation12]
    $region9: #{tpu_custom_call.1} parent=1 // pred_fallthru
      _
    %47 = shalt.err (0)
    %s49 = sshll.u32 %s40, 4
    %s50 = int_to_ptr.hbm [resolvable:$true] %s49
    %s51 = sshll.u32 %s41, 4
    %s52 = int_to_ptr.vmem [resolvable:$true] %s51
    %54 = dma.hbm_to_vmem [thread:$0]  %s50, 16, %s52, [#allocation3]
    %s55 = sld [smem:[#allocation5 + $0x2]]
    %p56 = scmp.gt.s32.totalorder %s55, 0
    %s57 = scalar_select %p56, %s55, 0
    %p58 = scmp.lt.s32.totalorder %s57, 2047
    %s59 = scalar_select %p58, %s57, 2047
    %s60 = scalar_lea.hbm %s1, %s59
    %s61 = scalar_lea.vmem [#allocation2], 2
    // Predicated region
    $region10: #{tpu_custom_call.1} parent=1 // pred_check
      _
    $region11: #{tpu_custom_call.1} parent=1 // pred_check_branch
      %63 = sbr.rel target = $region13
    $region12: #{tpu_custom_call.1} parent=1 // pred_region
      %64 = sst [smem:[#allocation10]] [#allocation15]
      %65 = sst [smem:[#allocation11]] [#allocation14]
    $region13: #{tpu_custom_call.1} parent=1 // pred_fallthru
      _
    %67 = shalt.err (0)
    %s69 = sshll.u32 %s60, 4
    %s70 = int_to_ptr.hbm [resolvable:$true] %s69
    %s71 = sshll.u32 %s61, 4
    %s72 = int_to_ptr.vmem [resolvable:$true] %s71
    %74 = dma.hbm_to_vmem [thread:$0]  %s70, 16, %s72, [#allocation3]
    %s75 = sld [smem:[#allocation5 + $0x3]]
    %p76 = scmp.gt.s32.totalorder %s75, 0
    %s77 = scalar_select %p76, %s75, 0
    %p78 = scmp.lt.s32.totalorder %s77, 2047
    %s79 = scalar_select %p78, %s77, 2047
    %s80 = scalar_lea.hbm %s1, %s79
    %s81 = scalar_lea.vmem [#allocation2], 3
    // Predicated region
    $region14: #{tpu_custom_call.1} parent=1 // pred_check
      _
    $region15: #{tpu_custom_call.1} parent=1 // pred_check_branch
      %83 = sbr.rel target = $region17
    $region16: #{tpu_custom_call.1} parent=1 // pred_region
      %84 = sst [smem:[#allocation10]] [#allocation17]
      %85 = sst [smem:[#allocation11]] [#allocation16]
    $region17: #{tpu_custom_call.1} parent=1 // pred_fallthru
      _
    %87 = shalt.err (0)
    %s89 = sshll.u32 %s80, 4
    %s90 = int_to_ptr.hbm [resolvable:$true] %s89
    %s91 = sshll.u32 %s81, 4
    %s92 = int_to_ptr.vmem [resolvable:$true] %s91
    %94 = dma.hbm_to_vmem [thread:$0]  %s90, 16, %s92, [#allocation3]
    %s95 = sld [smem:[#allocation5 + $0x80]]
    %p96 = scmp.gt.s32.totalorder %s95, 0
    %s97 = scalar_select %p96, %s95, 0
    %p98 = scmp.lt.s32.totalorder %s97, 2047
    %s99 = scalar_select %p98, %s97, 2047
    %s100 = scalar_lea.hbm %s1, %s99
    %s101 = scalar_lea.vmem [#allocation2], 4
    // Predicated region
    $region18: #{tpu_custom_call.1} parent=1 // pred_check
      _
    $region19: #{tpu_custom_call.1} parent=1 // pred_check_branch
      %103 = sbr.rel target = $region21
    $region20: #{tpu_custom_call.1} parent=1 // pred_region
      %104 = sst [smem:[#allocation10]] [#allocation19]
      %105 = sst [smem:[#allocation11]] [#allocation18]
    $region21: #{tpu_custom_call.1} parent=1 // pred_fallthru
      _
    %107 = shalt.err (0)
    %s109 = sshll.u32 %s100, 4
    %s110 = int_to_ptr.hbm [resolvable:$true] %s109
    %s111 = sshll.u32 %s101, 4
    %s112 = int_to_ptr.vmem [resolvable:$true] %s111
    %114 = dma.hbm_to_vmem [thread:$0]  %s110, 16, %s112, [#allocation3]
    %s115 = sld [smem:[#allocation5 + $0x81]]
    %p116 = scmp.gt.s32.totalorder %s115, 0
    %s117 = scalar_select %p116, %s115, 0
    %p118 = scmp.lt.s32.totalorder %s117, 2047
    %s119 = scalar_select %p118, %s117, 2047
    %s120 = scalar_lea.hbm %s1, %s119
    %s121 = scalar_lea.vmem [#allocation2], 5
    // Predicated region
    $region22: #{tpu_custom_call.1} parent=1 // pred_check
      _
    $region23: #{tpu_custom_call.1} parent=1 // pred_check_branch
      %123 = sbr.rel target = $region25
    $region24: #{tpu_custom_call.1} parent=1 // pred_region
      %124 = sst [smem:[#allocation10]] [#allocation21]
      %125 = sst [smem:[#allocation11]] [#allocation20]
    $region25: #{tpu_custom_call.1} parent=1 // pred_fallthru
      _
    %127 = shalt.err (0)
    %s129 = sshll.u32 %s120, 4
    %s130 = int_to_ptr.hbm [resolvable:$true] %s129
    %s131 = sshll.u32 %s121, 4
    %s132 = int_to_ptr.vmem [resolvable:$true] %s131
    %134 = dma.hbm_to_vmem [thread:$0]  %s130, 16, %s132, [#allocation3]
    %s135 = sld [smem:[#allocation5 + $0x82]]
    %p136 = scmp.gt.s32.totalorder %s135, 0
    %s137 = scalar_select %p136, %s135, 0
    %p138 = scmp.lt.s32.totalorder %s137, 2047
    %s139 = scalar_select %p138, %s137, 2047
    %s140 = scalar_lea.hbm %s1, %s139
    %s141 = scalar_lea.vmem [#allocation2], 6
    // Predicated region
    $region26: #{tpu_custom_call.1} parent=1 // pred_check
      _
    $region27: #{tpu_custom_call.1} parent=1 // pred_check_branch
      %143 = sbr.rel target = $region29
    $region28: #{tpu_custom_call.1} parent=1 // pred_region
      %144 = sst [smem:[#allocation10]] [#allocation23]
      %145 = sst [smem:[#allocation11]] [#allocation22]
    $region29: #{tpu_custom_call.1} parent=1 // pred_fallthru
      _
    %147 = shalt.err (0)
    %s149 = sshll.u32 %s140, 4
    %s150 = int_to_ptr.hbm [resolvable:$true] %s149
    %s151 = sshll.u32 %s141, 4
    %s152 = int_to_ptr.vmem [resolvable:$true] %s151
    %154 = dma.hbm_to_vmem [thread:$0]  %s150, 16, %s152, [#allocation3]
    %s155 = sld [smem:[#allocation5 + $0x83]]
    %p156 = scmp.gt.s32.totalorder %s155, 0
    %s157 = scalar_select %p156, %s155, 0
    %p158 = scmp.lt.s32.totalorder %s157, 2047
    %s159 = scalar_select %p158, %s157, 2047
    %s160 = scalar_lea.hbm %s1, %s159
    %s161 = scalar_lea.vmem [#allocation2], 7
    // Predicated region
    $region30: #{tpu_custom_call.1} parent=1 // pred_check
      _
    $region31: #{tpu_custom_call.1} parent=1 // pred_check_branch
      %163 = sbr.rel target = $region33
    $region32: #{tpu_custom_call.1} parent=1 // pred_region
      %164 = sst [smem:[#allocation10]] [#allocation25]
      %165 = sst [smem:[#allocation11]] [#allocation24]
    $region33: #{tpu_custom_call.1} parent=1 // pred_fallthru
      _
    %167 = shalt.err (0)
    %s169 = sshll.u32 %s160, 4
    %s170 = int_to_ptr.hbm [resolvable:$true] %s169
    %s171 = sshll.u32 %s161, 4
    %s172 = int_to_ptr.vmem [resolvable:$true] %s171
    %174 = dma.hbm_to_vmem [thread:$0]  %s170, 16, %s172, [#allocation3]
    %s175 = sld [smem:[#allocation5 + $0x100]]
    %p176 = scmp.gt.s32.totalorder %s175, 0
    %s177 = scalar_select %p176, %s175, 0
    %p178 = scmp.lt.s32.totalorder %s177, 2047
    %s179 = scalar_select %p178, %s177, 2047
    %s180 = scalar_lea.hbm %s1, %s179
    %s181 = scalar_lea.vmem [#allocation2], 8
    // Predicated region
    $region34: #{tpu_custom_call.1} parent=1 // pred_check
      _
    $region35: #{tpu_custom_call.1} parent=1 // pred_check_branch
      %183 = sbr.rel target = $region37
    $region36: #{tpu_custom_call.1} parent=1 // pred_region
      %184 = sst [smem:[#allocation10]] [#allocation27]
      %185 = sst [smem:[#allocation11]] [#allocation26]
    $region37: #{tpu_custom_call.1} parent=1 // pred_fallthru
      _
    %187 = shalt.err (0)
    %s189 = sshll.u32 %s180, 4
    %s190 = int_to_ptr.hbm [resolvable:$true] %s189
    %s191 = sshll.u32 %s181, 4
    %s192 = int_to_ptr.vmem [resolvable:$true] %s191
    %194 = dma.hbm_to_vmem [thread:$0]  %s190, 16, %s192, [#allocation3]
    %s195 = sld [smem:[#allocation5 + $0x101]]
    %p196 = scmp.gt.s32.totalorder %s195, 0
    %s197 = scalar_select %p196, %s195, 0
    %p198 = scmp.lt.s32.totalorder %s197, 2047
    %s199 = scalar_select %p198, %s197, 2047
    %s200 = scalar_lea.hbm %s1, %s199
    %s201 = scalar_lea.vmem [#allocation2], 9
    // Predicated region
    $region38: #{tpu_custom_call.1} parent=1 // pred_check
      _
    $region39: #{tpu_custom_call.1} parent=1 // pred_check_branch
      %203 = sbr.rel target = $region41
    $region40: #{tpu_custom_call.1} parent=1 // pred_region
      %204 = sst [smem:[#allocation10]] [#allocation29]
      %205 = sst [smem:[#allocation11]] [#allocation28]
    $region41: #{tpu_custom_call.1} parent=1 // pred_fallthru
      _
    %207 = shalt.err (0)
    %s209 = sshll.u32 %s200, 4
    %s210 = int_to_ptr.hbm [resolvable:$true] %s209
    %s211 = sshll.u32 %s201, 4
    %s212 = int_to_ptr.vmem [resolvable:$true] %s211
    %214 = dma.hbm_to_vmem [thread:$0]  %s210, 16, %s212, [#allocation3]
    %s215 = sld [smem:[#allocation5 + $0x102]]
    %p216 = scmp.gt.s32.totalorder %s215, 0
    %s217 = scalar_select %p216, %s215, 0
    %p218 = scmp.lt.s32.totalorder %s217, 2047
    %s219 = scalar_select %p218, %s217, 2047
    %s220 = scalar_lea.hbm %s1, %s219
    %s221 = scalar_lea.vmem [#allocation2], 10
    // Predicated region
    $region42: #{tpu_custom_call.1} parent=1 // pred_check
      _
    $region43: #{tpu_custom_call.1} parent=1 // pred_check_branch
      %223 = sbr.rel target = $region45
    $region44: #{tpu_custom_call.1} parent=1 // pred_region
      %224 = sst [smem:[#allocation10]] [#allocation31]
      %225 = sst [smem:[#allocation11]] [#allocation30]
    $region45: #{tpu_custom_call.1} parent=1 // pred_fallthru
      _
    %227 = shalt.err (0)
    %s229 = sshll.u32 %s220, 4
    %s230 = int_to_ptr.hbm [resolvable:$true] %s229
    %s231 = sshll.u32 %s221, 4
    %s232 = int_to_ptr.vmem [resolvable:$true] %s231
    %234 = dma.hbm_to_vmem [thread:$0]  %s230, 16, %s232, [#allocation3]
    %s235 = sld [smem:[#allocation5 + $0x103]]
    %p236 = scmp.gt.s32.totalorder %s235, 0
    %s237 = scalar_select %p236, %s235, 0
    %p238 = scmp.lt.s32.totalorder %s237, 2047
    %s239 = scalar_select %p238, %s237, 2047
    %s240 = scalar_lea.hbm %s1, %s239
    %s241 = scalar_lea.vmem [#allocation2], 11
    // Predicated region
    $region46: #{tpu_custom_call.1} parent=1 // pred_check
      _
    $region47: #{tpu_custom_call.1} parent=1 // pred_check_branch
      %243 = sbr.rel target = $region49
    $region48: #{tpu_custom_call.1} parent=1 // pred_region
      %244 = sst [smem:[#allocation10]] [#allocation33]
      %245 = sst [smem:[#allocation11]] [#allocation32]
    $region49: #{tpu_custom_call.1} parent=1 // pred_fallthru
      _
    %247 = shalt.err (0)
    %s249 = sshll.u32 %s240, 4
    %s250 = int_to_ptr.hbm [resolvable:$true] %s249
    %s251 = sshll.u32 %s241, 4
    %s252 = int_to_ptr.vmem [resolvable:$true] %s251
    %254 = dma.hbm_to_vmem [thread:$0]  %s250, 16, %s252, [#allocation3]
    %s255 = sld [smem:[#allocation5 + $0x180]]
    %p256 = scmp.gt.s32.totalorder %s255, 0
    %s257 = scalar_select %p256, %s255, 0
    %p258 = scmp.lt.s32.totalorder %s257, 2047
    %s259 = scalar_select %p258, %s257, 2047
    %s260 = scalar_lea.hbm %s1, %s259
    %s261 = scalar_lea.vmem [#allocation2], 12
    // Predicated region
    $region50: #{tpu_custom_call.1} parent=1 // pred_check
      _
    $region51: #{tpu_custom_call.1} parent=1 // pred_check_branch
      %263 = sbr.rel target = $region53
    $region52: #{tpu_custom_call.1} parent=1 // pred_region
      %264 = sst [smem:[#allocation10]] [#allocation35]
      %265 = sst [smem:[#allocation11]] [#allocation34]
    $region53: #{tpu_custom_call.1} parent=1 // pred_fallthru
      _
    %267 = shalt.err (0)
    %s269 = sshll.u32 %s260, 4
    %s270 = int_to_ptr.hbm [resolvable:$true] %s269
    %s271 = sshll.u32 %s261, 4
    %s272 = int_to_ptr.vmem [resolvable:$true] %s271
    %274 = dma.hbm_to_vmem [thread:$0]  %s270, 16, %s272, [#allocation3]
    %s275 = sld [smem:[#allocation5 + $0x181]]
    %p276 = scmp.gt.s32.totalorder %s275, 0
    %s277 = scalar_select %p276, %s275, 0
    %p278 = scmp.lt.s32.totalorder %s277, 2047
    %s279 = scalar_select %p278, %s277, 2047
    %s280 = scalar_lea.hbm %s1, %s279
    %s281 = scalar_lea.vmem [#allocation2], 13
    // Predicated region
    $region54: #{tpu_custom_call.1} parent=1 // pred_check
      _
    $region55: #{tpu_custom_call.1} parent=1 // pred_check_branch
      %283 = sbr.rel target = $region57
    $region56: #{tpu_custom_call.1} parent=1 // pred_region
      %284 = sst [smem:[#allocation10]] [#allocation37]
      %285 = sst [smem:[#allocation11]] [#allocation36]
    $region57: #{tpu_custom_call.1} parent=1 // pred_fallthru
      _
    %287 = shalt.err (0)
    %s289 = sshll.u32 %s280, 4
    %s290 = int_to_ptr.hbm [resolvable:$true] %s289
    %s291 = sshll.u32 %s281, 4
    %s292 = int_to_ptr.vmem [resolvable:$true] %s291
    %294 = dma.hbm_to_vmem [thread:$0]  %s290, 16, %s292, [#allocation3]
    %s295 = sld [smem:[#allocation5 + $0x182]]
    %p296 = scmp.gt.s32.totalorder %s295, 0
    %s297 = scalar_select %p296, %s295, 0
    %p298 = scmp.lt.s32.totalorder %s297, 2047
    %s299 = scalar_select %p298, %s297, 2047
    %s300 = scalar_lea.hbm %s1, %s299
    %s301 = scalar_lea.vmem [#allocation2], 14
    // Predicated region
    $region58: #{tpu_custom_call.1} parent=1 // pred_check
      _
    $region59: #{tpu_custom_call.1} parent=1 // pred_check_branch
      %303 = sbr.rel target = $region61
    $region60: #{tpu_custom_call.1} parent=1 // pred_region
      %304 = sst [smem:[#allocation10]] [#allocation39]
      %305 = sst [smem:[#allocation11]] [#allocation38]
    $region61: #{tpu_custom_call.1} parent=1 // pred_fallthru
      _
    %307 = shalt.err (0)
    %s309 = sshll.u32 %s300, 4
    %s310 = int_to_ptr.hbm [resolvable:$true] %s309
    %s311 = sshll.u32 %s301, 4
    %s312 = int_to_ptr.vmem [resolvable:$true] %s311
    %314 = dma.hbm_to_vmem [thread:$0]  %s310, 16, %s312, [#allocation3]
    %s315 = sld [smem:[#allocation5 + $0x183]]
    %p316 = scmp.gt.s32.totalorder %s315, 0
    %s317 = scalar_select %p316, %s315, 0
    %p318 = scmp.lt.s32.totalorder %s317, 2047
    %s319 = scalar_select %p318, %s317, 2047
    %s320 = scalar_lea.hbm %s1, %s319
    %s321 = scalar_lea.vmem [#allocation2], 15
    // Predicated region
    $region62: #{tpu_custom_call.1} parent=1 // pred_check
      _
    $region63: #{tpu_custom_call.1} parent=1 // pred_check_branch
      %323 = sbr.rel target = $region65
    $region64: #{tpu_custom_call.1} parent=1 // pred_region
      %324 = sst [smem:[#allocation10]] [#allocation41]
      %325 = sst [smem:[#allocation11]] [#allocation40]
    $region65: #{tpu_custom_call.1} parent=1 // pred_fallthru
      _
    %327 = shalt.err (0)
    %s329 = sshll.u32 %s320, 4
    %s330 = int_to_ptr.hbm [resolvable:$true] %s329
    %s331 = sshll.u32 %s321, 4
    %s332 = int_to_ptr.vmem [resolvable:$true] %s331
    %334 = dma.hbm_to_vmem [thread:$0]  %s330, 16, %s332, [#allocation3]
    %s335 = sld [smem:[#allocation5 + $0x200]]
    %p336 = scmp.gt.s32.totalorder %s335, 0
    %s337 = scalar_select %p336, %s335, 0
    %p338 = scmp.lt.s32.totalorder %s337, 2047
    %s339 = scalar_select %p338, %s337, 2047
    %s340 = scalar_lea.hbm %s1, %s339
    %s341 = scalar_lea.vmem [#allocation2], 16
    // Predicated region
    $region66: #{tpu_custom_call.1} parent=1 // pred_check
      _
    $region67: #{tpu_custom_call.1} parent=1 // pred_check_branch
      %343 = sbr.rel target = $region69
    $region68: #{tpu_custom_call.1} parent=1 // pred_region
      %344 = sst [smem:[#allocation10]] [#allocation43]
      %345 = sst [smem:[#allocation11]] [#allocation42]
    $region69: #{tpu_custom_call.1} parent=1 // pred_fallthru
      _
    %347 = shalt.err (0)
    %s349 = sshll.u32 %s340, 4
    %s350 = int_to_ptr.hbm [resolvable:$true] %s349
    %s351 = sshll.u32 %s341, 4
    %s352 = int_to_ptr.vmem [resolvable:$true] %s351
    %354 = dma.hbm_to_vmem [thread:$0]  %s350, 16, %s352, [#allocation3]
    %s355 = sld [smem:[#allocation5 + $0x201]]
    %p356 = scmp.gt.s32.totalorder %s355, 0
    %s357 = scalar_select %p356, %s355, 0
    %p358 = scmp.lt.s32.totalorder %s357, 2047
    %s359 = scalar_select %p358, %s357, 2047
    %s360 = scalar_lea.hbm %s1, %s359
    %s361 = scalar_lea.vmem [#allocation2], 17
    // Predicated region
    $region70: #{tpu_custom_call.1} parent=1 // pred_check
      _
    $region71: #{tpu_custom_call.1} parent=1 // pred_check_branch
      %363 = sbr.rel target = $region73
    $region72: #{tpu_custom_call.1} parent=1 // pred_region
      %364 = sst [smem:[#allocation10]] [#allocation45]
      %365 = sst [smem:[#allocation11]] [#allocation44]
    $region73: #{tpu_custom_call.1} parent=1 // pred_fallthru
      _
    %367 = shalt.err (0)
    %s369 = sshll.u32 %s360, 4
    %s370 = int_to_ptr.hbm [resolvable:$true] %s369
    %s371 = sshll.u32 %s361, 4
    %s372 = int_to_ptr.vmem [resolvable:$true] %s371
    %374 = dma.hbm_to_vmem [thread:$0]  %s370, 16, %s372, [#allocation3]
    %s375 = sld [smem:[#allocation5 + $0x202]]
    %p376 = scmp.gt.s32.totalorder %s375, 0
    %s377 = scalar_select %p376, %s375, 0
    %p378 = scmp.lt.s32.totalorder %s377, 2047
    %s379 = scalar_select %p378, %s377, 2047
    %s380 = scalar_lea.hbm %s1, %s379
    %s381 = scalar_lea.vmem [#allocation2], 18
    // Predicated region
    $region74: #{tpu_custom_call.1} parent=1 // pred_check
      _
    $region75: #{tpu_custom_call.1} parent=1 // pred_check_branch
      %383 = sbr.rel target = $region77
    $region76: #{tpu_custom_call.1} parent=1 // pred_region
      %384 = sst [smem:[#allocation10]] [#allocation47]
      %385 = sst [smem:[#allocation11]] [#allocation46]
    $region77: #{tpu_custom_call.1} parent=1 // pred_fallthru
      _
    %387 = shalt.err (0)
    %s389 = sshll.u32 %s380, 4
    %s390 = int_to_ptr.hbm [resolvable:$true] %s389
    %s391 = sshll.u32 %s381, 4
    %s392 = int_to_ptr.vmem [resolvable:$true] %s391
    %394 = dma.hbm_to_vmem [thread:$0]  %s390, 16, %s392, [#allocation3]
    %s395 = sld [smem:[#allocation5 + $0x203]]
    %p396 = scmp.gt.s32.totalorder %s395, 0
    %s397 = scalar_select %p396, %s395, 0
    %p398 = scmp.lt.s32.totalorder %s397, 2047
    %s399 = scalar_select %p398, %s397, 2047
    %s400 = scalar_lea.hbm %s1, %s399
    %s401 = scalar_lea.vmem [#allocation2], 19
    // Predicated region
    $region78: #{tpu_custom_call.1} parent=1 // pred_check
      _
    $region79: #{tpu_custom_call.1} parent=1 // pred_check_branch
      %403 = sbr.rel target = $region81
    $region80: #{tpu_custom_call.1} parent=1 // pred_region
      %404 = sst [smem:[#allocation10]] [#allocation49]
      %405 = sst [smem:[#allocation11]] [#allocation48]
    $region81: #{tpu_custom_call.1} parent=1 // pred_fallthru
      _
    %407 = shalt.err (0)
    %s409 = sshll.u32 %s400, 4
    %s410 = int_to_ptr.hbm [resolvable:$true] %s409
    %s411 = sshll.u32 %s401, 4
    %s412 = int_to_ptr.vmem [resolvable:$true] %s411
    %414 = dma.hbm_to_vmem [thread:$0]  %s410, 16, %s412, [#allocation3]
    %s415 = sld [smem:[#allocation5 + $0x280]]
    %p416 = scmp.gt.s32.totalorder %s415, 0
    %s417 = scalar_select %p416, %s415, 0
    %p418 = scmp.lt.s32.totalorder %s417, 2047
    %s419 = scalar_select %p418, %s417, 2047
    %s420 = scalar_lea.hbm %s1, %s419
    %s421 = scalar_lea.vmem [#allocation2], 20
    // Predicated region
    $region82: #{tpu_custom_call.1} parent=1 // pred_check
      _
    $region83: #{tpu_custom_call.1} parent=1 // pred_check_branch
      %423 = sbr.rel target = $region85
    $region84: #{tpu_custom_call.1} parent=1 // pred_region
      %424 = sst [smem:[#allocation10]] [#allocation51]
      %425 = sst [smem:[#allocation11]] [#allocation50]
    $region85: #{tpu_custom_call.1} parent=1 // pred_fallthru
      _
    %427 = shalt.err (0)
    %s429 = sshll.u32 %s420, 4
    %s430 = int_to_ptr.hbm [resolvable:$true] %s429
    %s431 = sshll.u32 %s421, 4
    %s432 = int_to_ptr.vmem [resolvable:$true] %s431
    %434 = dma.hbm_to_vmem [thread:$0]  %s430, 16, %s432, [#allocation3]
    %s435 = sld [smem:[#allocation5 + $0x281]]
    %p436 = scmp.gt.s32.totalorder %s435, 0
    %s437 = scalar_select %p436, %s435, 0
    %p438 = scmp.lt.s32.totalorder %s437, 2047
    %s439 = scalar_select %p438, %s437, 2047
    %s440 = scalar_lea.hbm %s1, %s439
    %s441 = scalar_lea.vmem [#allocation2], 21
    // Predicated region
    $region86: #{tpu_custom_call.1} parent=1 // pred_check
      _
    $region87: #{tpu_custom_call.1} parent=1 // pred_check_branch
      %443 = sbr.rel target = $region89
    $region88: #{tpu_custom_call.1} parent=1 // pred_region
      %444 = sst [smem:[#allocation10]] [#allocation53]
      %445 = sst [smem:[#allocation11]] [#allocation52]
    $region89: #{tpu_custom_call.1} parent=1 // pred_fallthru
      _
    %447 = shalt.err (0)
    %s449 = sshll.u32 %s440, 4
    %s450 = int_to_ptr.hbm [resolvable:$true] %s449
    %s451 = sshll.u32 %s441, 4
    %s452 = int_to_ptr.vmem [resolvable:$true] %s451
    %454 = dma.hbm_to_vmem [thread:$0]  %s450, 16, %s452, [#allocation3]
    %s455 = sld [smem:[#allocation5 + $0x282]]
    %p456 = scmp.gt.s32.totalorder %s455, 0
    %s457 = scalar_select %p456, %s455, 0
    %p458 = scmp.lt.s32.totalorder %s457, 2047
    %s459 = scalar_select %p458, %s457, 2047
    %s460 = scalar_lea.hbm %s1, %s459
    %s461 = scalar_lea.vmem [#allocation2], 22
    // Predicated region
    $region90: #{tpu_custom_call.1} parent=1 // pred_check
      _
    $region91: #{tpu_custom_call.1} parent=1 // pred_check_branch
      %463 = sbr.rel target = $region93
    $region92: #{tpu_custom_call.1} parent=1 // pred_region
      %464 = sst [smem:[#allocation10]] [#allocation55]
      %465 = sst [smem:[#allocation11]] [#allocation54]
    $region93: #{tpu_custom_call.1} parent=1 // pred_fallthru
      _
    %467 = shalt.err (0)
    %s469 = sshll.u32 %s460, 4
    %s470 = int_to_ptr.hbm [resolvable:$true] %s469
    %s471 = sshll.u32 %s461, 4
    %s472 = int_to_ptr.vmem [resolvable:$true] %s471
    %474 = dma.hbm_to_vmem [thread:$0]  %s470, 16, %s472, [#allocation3]
    %s475 = sld [smem:[#allocation5 + $0x283]]
    %p476 = scmp.gt.s32.totalorder %s475, 0
    %s477 = scalar_select %p476, %s475, 0
    %p478 = scmp.lt.s32.totalorder %s477, 2047
    %s479 = scalar_select %p478, %s477, 2047
    %s480 = scalar_lea.hbm %s1, %s479
    %s481 = scalar_lea.vmem [#allocation2], 23
    // Predicated region
    $region94: #{tpu_custom_call.1} parent=1 // pred_check
      _
    $region95: #{tpu_custom_call.1} parent=1 // pred_check_branch
      %483 = sbr.rel target = $region97
    $region96: #{tpu_custom_call.1} parent=1 // pred_region
      %484 = sst [smem:[#allocation10]] [#allocation57]
      %485 = sst [smem:[#allocation11]] [#allocation56]
    $region97: #{tpu_custom_call.1} parent=1 // pred_fallthru
      _
    %487 = shalt.err (0)
    %s489 = sshll.u32 %s480, 4
    %s490 = int_to_ptr.hbm [resolvable:$true] %s489
    %s491 = sshll.u32 %s481, 4
    %s492 = int_to_ptr.vmem [resolvable:$true] %s491
    %494 = dma.hbm_to_vmem [thread:$0]  %s490, 16, %s492, [#allocation3]
    %s495 = sld [smem:[#allocation5 + $0x300]]
    %p496 = scmp.gt.s32.totalorder %s495, 0
    %s497 = scalar_select %p496, %s495, 0
    %p498 = scmp.lt.s32.totalorder %s497, 2047
    %s499 = scalar_select %p498, %s497, 2047
    %s500 = scalar_lea.hbm %s1, %s499
    %s501 = scalar_lea.vmem [#allocation2], 24
    // Predicated region
    $region98: #{tpu_custom_call.1} parent=1 // pred_check
      _
    $region99: #{tpu_custom_call.1} parent=1 // pred_check_branch
      %503 = sbr.rel target = $region101
    $region100: #{tpu_custom_call.1} parent=1 // pred_region
      %504 = sst [smem:[#allocation10]] [#allocation59]
      %505 = sst [smem:[#allocation11]] [#allocation58]
    $region101: #{tpu_custom_call.1} parent=1 // pred_fallthru
      _
    %507 = shalt.err (0)
    %s509 = sshll.u32 %s500, 4
    %s510 = int_to_ptr.hbm [resolvable:$true] %s509
    %s511 = sshll.u32 %s501, 4
    %s512 = int_to_ptr.vmem [resolvable:$true] %s511
    %514 = dma.hbm_to_vmem [thread:$0]  %s510, 16, %s512, [#allocation3]
    %s515 = sld [smem:[#allocation5 + $0x301]]
    %p516 = scmp.gt.s32.totalorder %s515, 0
    %s517 = scalar_select %p516, %s515, 0
    %p518 = scmp.lt.s32.totalorder %s517, 2047
    %s519 = scalar_select %p518, %s517, 2047
    %s520 = scalar_lea.hbm %s1, %s519
    %s521 = scalar_lea.vmem [#allocation2], 25
    // Predicated region
    $region102: #{tpu_custom_call.1} parent=1 // pred_check
      _
    $region103: #{tpu_custom_call.1} parent=1 // pred_check_branch
      %523 = sbr.rel target = $region105
    $region104: #{tpu_custom_call.1} parent=1 // pred_region
      %524 = sst [smem:[#allocation10]] [#allocation61]
      %525 = sst [smem:[#allocation11]] [#allocation60]
    $region105: #{tpu_custom_call.1} parent=1 // pred_fallthru
      _
    %527 = shalt.err (0)
    %s529 = sshll.u32 %s520, 4
    %s530 = int_to_ptr.hbm [resolvable:$true] %s529
    %s531 = sshll.u32 %s521, 4
    %s532 = int_to_ptr.vmem [resolvable:$true] %s531
    %534 = dma.hbm_to_vmem [thread:$0]  %s530, 16, %s532, [#allocation3]
    %s535 = sld [smem:[#allocation5 + $0x302]]
    %p536 = scmp.gt.s32.totalorder %s535, 0
    %s537 = scalar_select %p536, %s535, 0
    %p538 = scmp.lt.s32.totalorder %s537, 2047
    %s539 = scalar_select %p538, %s537, 2047
    %s540 = scalar_lea.hbm %s1, %s539
    %s541 = scalar_lea.vmem [#allocation2], 26
    // Predicated region
    $region106: #{tpu_custom_call.1} parent=1 // pred_check
      _
    $region107: #{tpu_custom_call.1} parent=1 // pred_check_branch
      %543 = sbr.rel target = $region109
    $region108: #{tpu_custom_call.1} parent=1 // pred_region
      %544 = sst [smem:[#allocation10]] [#allocation63]
      %545 = sst [smem:[#allocation11]] [#allocation62]
    $region109: #{tpu_custom_call.1} parent=1 // pred_fallthru
      _
    %547 = shalt.err (0)
    %s549 = sshll.u32 %s540, 4
    %s550 = int_to_ptr.hbm [resolvable:$true] %s549
    %s551 = sshll.u32 %s541, 4
    %s552 = int_to_ptr.vmem [resolvable:$true] %s551
    %554 = dma.hbm_to_vmem [thread:$0]  %s550, 16, %s552, [#allocation3]
    %s555 = sld [smem:[#allocation5 + $0x303]]
    %p556 = scmp.gt.s32.totalorder %s555, 0
    %s557 = scalar_select %p556, %s555, 0
    %p558 = scmp.lt.s32.totalorder %s557, 2047
    %s559 = scalar_select %p558, %s557, 2047
    %s560 = scalar_lea.hbm %s1, %s559
    %s561 = scalar_lea.vmem [#allocation2], 27
    // Predicated region
    $region110: #{tpu_custom_call.1} parent=1 // pred_check
      _
    $region111: #{tpu_custom_call.1} parent=1 // pred_check_branch
      %563 = sbr.rel target = $region113
    $region112: #{tpu_custom_call.1} parent=1 // pred_region
      %564 = sst [smem:[#allocation10]] [#allocation65]
      %565 = sst [smem:[#allocation11]] [#allocation64]
    $region113: #{tpu_custom_call.1} parent=1 // pred_fallthru
      _
    %567 = shalt.err (0)
    %s569 = sshll.u32 %s560, 4
    %s570 = int_to_ptr.hbm [resolvable:$true] %s569
    %s571 = sshll.u32 %s561, 4
    %s572 = int_to_ptr.vmem [resolvable:$true] %s571
    %574 = dma.hbm_to_vmem [thread:$0]  %s570, 16, %s572, [#allocation3]
    %s575 = sld [smem:[#allocation5 + $0x380]]
    %p576 = scmp.gt.s32.totalorder %s575, 0
    %s577 = scalar_select %p576, %s575, 0
    %p578 = scmp.lt.s32.totalorder %s577, 2047
    %s579 = scalar_select %p578, %s577, 2047
    %s580 = scalar_lea.hbm %s1, %s579
    %s581 = scalar_lea.vmem [#allocation2], 28
    // Predicated region
    $region114: #{tpu_custom_call.1} parent=1 // pred_check
      _
    $region115: #{tpu_custom_call.1} parent=1 // pred_check_branch
      %583 = sbr.rel target = $region117
    $region116: #{tpu_custom_call.1} parent=1 // pred_region
      %584 = sst [smem:[#allocation10]] [#allocation67]
      %585 = sst [smem:[#allocation11]] [#allocation66]
    $region117: #{tpu_custom_call.1} parent=1 // pred_fallthru
      _
    %587 = shalt.err (0)
    %s589 = sshll.u32 %s580, 4
    %s590 = int_to_ptr.hbm [resolvable:$true] %s589
    %s591 = sshll.u32 %s581, 4
    %s592 = int_to_ptr.vmem [resolvable:$true] %s591
    %594 = dma.hbm_to_vmem [thread:$0]  %s590, 16, %s592, [#allocation3]
    %s595 = sld [smem:[#allocation5 + $0x381]]
    %p596 = scmp.gt.s32.totalorder %s595, 0
    %s597 = scalar_select %p596, %s595, 0
    %p598 = scmp.lt.s32.totalorder %s597, 2047
    %s599 = scalar_select %p598, %s597, 2047
    %s600 = scalar_lea.hbm %s1, %s599
    %s601 = scalar_lea.vmem [#allocation2], 29
    // Predicated region
    $region118: #{tpu_custom_call.1} parent=1 // pred_check
      _
    $region119: #{tpu_custom_call.1} parent=1 // pred_check_branch
      %603 = sbr.rel target = $region121
    $region120: #{tpu_custom_call.1} parent=1 // pred_region
      %604 = sst [smem:[#allocation10]] [#allocation69]
      %605 = sst [smem:[#allocation11]] [#allocation68]
    $region121: #{tpu_custom_call.1} parent=1 // pred_fallthru
      _
    %607 = shalt.err (0)
    %s609 = sshll.u32 %s600, 4
    %s610 = int_to_ptr.hbm [resolvable:$true] %s609
    %s611 = sshll.u32 %s601, 4
    %s612 = int_to_ptr.vmem [resolvable:$true] %s611
    %614 = dma.hbm_to_vmem [thread:$0]  %s610, 16, %s612, [#allocation3]
    %s615 = sld [smem:[#allocation5 + $0x382]]
    %p616 = scmp.gt.s32.totalorder %s615, 0
    %s617 = scalar_select %p616, %s615, 0
    %p618 = scmp.lt.s32.totalorder %s617, 2047
    %s619 = scalar_select %p618, %s617, 2047
    %s620 = scalar_lea.hbm %s1, %s619
    %s621 = scalar_lea.vmem [#allocation2], 30
    // Predicated region
    $region122: #{tpu_custom_call.1} parent=1 // pred_check
      _
    $region123: #{tpu_custom_call.1} parent=1 // pred_check_branch
      %623 = sbr.rel target = $region125
    $region124: #{tpu_custom_call.1} parent=1 // pred_region
      %624 = sst [smem:[#allocation10]] [#allocation71]
      %625 = sst [smem:[#allocation11]] [#allocation70]
    $region125: #{tpu_custom_call.1} parent=1 // pred_fallthru
      _
    %627 = shalt.err (0)
    %s629 = sshll.u32 %s620, 4
    %s630 = int_to_ptr.hbm [resolvable:$true] %s629
    %s631 = sshll.u32 %s621, 4
    %s632 = int_to_ptr.vmem [resolvable:$true] %s631
    %634 = dma.hbm_to_vmem [thread:$0]  %s630, 16, %s632, [#allocation3]
    %s635 = sld [smem:[#allocation5 + $0x383]]
    %p636 = scmp.gt.s32.totalorder %s635, 0
    %s637 = scalar_select %p636, %s635, 0
    %p638 = scmp.lt.s32.totalorder %s637, 2047
    %s639 = scalar_select %p638, %s637, 2047
    %s640 = scalar_lea.hbm %s1, %s639
    %s641 = scalar_lea.vmem [#allocation2], 31
    // Predicated region
    $region126: #{tpu_custom_call.1} parent=1 // pred_check
      _
    $region127: #{tpu_custom_call.1} parent=1 // pred_check_branch
      %643 = sbr.rel target = $region129
    $region128: #{tpu_custom_call.1} parent=1 // pred_region
      %644 = sst [smem:[#allocation10]] [#allocation73]
      %645 = sst [smem:[#allocation11]] [#allocation72]
    $region129: #{tpu_custom_call.1} parent=1 // pred_fallthru
      _
    %647 = shalt.err (0)
    %s649 = sshll.u32 %s640, 4
    %s650 = int_to_ptr.hbm [resolvable:$true] %s649
    %s651 = sshll.u32 %s641, 4
    %s652 = int_to_ptr.vmem [resolvable:$true] %s651
    %654 = dma.hbm_to_vmem [thread:$0]  %s650, 16, %s652, [#allocation3]
    %s655 = smul.u32 1, 1
    %s656 = sshll.u32 %s655, 4
    %657 = dma.done [#allocation3], %s656
    %s658 = sshll.u32 %s655, 4
    %659 = dma.done [#allocation3], %s658
    %s660 = sshll.u32 %s655, 4
    %661 = dma.done [#allocation3], %s660
    %s662 = sshll.u32 %s655, 4
    %663 = dma.done [#allocation3], %s662
    %s664 = sshll.u32 %s655, 4
    %665 = dma.done [#allocation3], %s664
    %s666 = sshll.u32 %s655, 4
    %667 = dma.done [#allocation3], %s666
    %s668 = sshll.u32 %s655, 4
    %669 = dma.done [#allocation3], %s668
    %s670 = sshll.u32 %s655, 4
    %671 = dma.done [#allocation3], %s670
    %s672 = sshll.u32 %s655, 4
    %673 = dma.done [#allocation3], %s672
    %s674 = sshll.u32 %s655, 4
    %675 = dma.done [#allocation3], %s674
    %s676 = sshll.u32 %s655, 4
    %677 = dma.done [#allocation3], %s676
    %s678 = sshll.u32 %s655, 4
    %679 = dma.done [#allocation3], %s678
    %s680 = sshll.u32 %s655, 4
    %681 = dma.done [#allocation3], %s680
    %s682 = sshll.u32 %s655, 4
    %683 = dma.done [#allocation3], %s682
    %s684 = sshll.u32 %s655, 4
    %685 = dma.done [#allocation3], %s684
    %s686 = sshll.u32 %s655, 4
    %687 = dma.done [#allocation3], %s686
    %s688 = sshll.u32 %s655, 4
    %689 = dma.done [#allocation3], %s688
    %s690 = sshll.u32 %s655, 4
    %691 = dma.done [#allocation3], %s690
    %s692 = sshll.u32 %s655, 4
    %693 = dma.done [#allocation3], %s692
    %s694 = sshll.u32 %s655, 4
    %695 = dma.done [#allocation3], %s694
    %s696 = sshll.u32 %s655, 4
    %697 = dma.done [#allocation3], %s696
    %s698 = sshll.u32 %s655, 4
    %699 = dma.done [#allocation3], %s698
    %s700 = sshll.u32 %s655, 4
    %701 = dma.done [#allocation3], %s700
    %s702 = sshll.u32 %s655, 4
    %703 = dma.done [#allocation3], %s702
    %s704 = sshll.u32 %s655, 4
    %705 = dma.done [#allocation3], %s704
    %s706 = sshll.u32 %s655, 4
    %707 = dma.done [#allocation3], %s706
    %s708 = sshll.u32 %s655, 4
    %709 = dma.done [#allocation3], %s708
    %s710 = sshll.u32 %s655, 4
    %711 = dma.done [#allocation3], %s710
    %s712 = sshll.u32 %s655, 4
    %713 = dma.done [#allocation3], %s712
    %s714 = sshll.u32 %s655, 4
    %715 = dma.done [#allocation3], %s714
    %s716 = sshll.u32 %s655, 4
    %717 = dma.done [#allocation3], %s716
    %s718 = sshll.u32 %s655, 4
    %719 = dma.done [#allocation3], %s718
    %v720 = vld [vmem:[#allocation2] sm:$0xf]
    %vm721 = vcmask 1043456
    %v722 = vsel %vm721, %v720, 0.0
    %v723 = vrot.slane %v722, 4
    %v724 = vadd.f32 %v722, %v723
    %v725 = vrot.slane %v724, 2
    %v726 = vadd.f32 %v724, %v725
    %v727 = vrot.slane %v726, 1
    %v728 = vadd.f32 %v726, %v727
    %v729 = vmul.f32 %v728, 0.25
    %v730 = vpack.c.bf16 %v729, %v729
    %vm731 = vcmask 1040384
    %vm732 = vsmask.f32 256
    %vm733 = vmand %vm731, %vm732
    %v734 = vld [vmem:[#allocation6] sm:$0x1]
    %v735 = vsel %vm733, %v730, %v734
    %736 = vst [vmem:[#allocation6] sm:$0x1] %v735
    %v737 = vld [vmem:[#allocation2 + $0x4] sm:$0xf]
    %v738 = vsel %vm721, %v737, 0.0
    %v739 = vrot.slane %v738, 4
    %v740 = vadd.f32 %v738, %v739
    %v741 = vrot.slane %v740, 2
    %v742 = vadd.f32 %v740, %v741
    %v743 = vrot.slane %v742, 1
    %v744 = vadd.f32 %v742, %v743
    %v745 = vmul.f32 %v744, 0.25
    %v746 = vpack.c.bf16 %v745, %v745
    %vm747 = vsmask.f32 7938
    %vm748 = vmand %vm731, %vm747
    %v749 = vld [vmem:[#allocation6] sm:$0x1]
    %v750 = vsel %vm748, %v746, %v749
    %751 = vst [vmem:[#allocation6] sm:$0x1] %v750
    %v752 = vld [vmem:[#allocation2 + $0x8] sm:$0xf]
    %v753 = vsel %vm721, %v752, 0.0
    %v754 = vrot.slane %v753, 4
    %v755 = vadd.f32 %v753, %v754
    %v756 = vrot.slane %v755, 2
    %v757 = vadd.f32 %v755, %v756
    %v758 = vrot.slane %v757, 1
    %v759 = vadd.f32 %v757, %v758
    %v760 = vmul.f32 %v759, 0.25
    %v761 = vpack.c.bf16 %v760, %v760
    %vm762 = vcmask 1041409
    %vm763 = vsmask.f32 1280
    %vm764 = vmand %vm762, %vm763
    %v765 = vld [vmem:[#allocation6] sm:$0x2]
    %v766 = vsel %vm764, %v761, %v765
    %767 = vst [vmem:[#allocation6] sm:$0x2] %v766
    %v768 = vld [vmem:[#allocation2 + $0xc] sm:$0xf]
    %v769 = vsel %vm721, %v768, 0.0
    %v770 = vrot.slane %v769, 4
    %v771 = vadd.f32 %v769, %v770
    %v772 = vrot.slane %v771, 2
    %v773 = vadd.f32 %v771, %v772
    %v774 = vrot.slane %v773, 1
    %v775 = vadd.f32 %v773, %v774
    %v776 = vmul.f32 %v775, 0.25
    %v777 = vpack.c.bf16 %v776, %v776
    %vm778 = vsmask.f32 7942
    %vm779 = vmand %vm762, %vm778
    %v780 = vld [vmem:[#allocation6] sm:$0x2]
    %v781 = vsel %vm779, %v777, %v780
    %782 = vst [vmem:[#allocation6] sm:$0x2] %v781
    %v783 = vld [vmem:[#allocation2 + $0x10] sm:$0xf]
    %v784 = vsel %vm721, %v783, 0.0
    %v785 = vrot.slane %v784, 4
    %v786 = vadd.f32 %v784, %v785
    %v787 = vrot.slane %v786, 2
    %v788 = vadd.f32 %v786, %v787
    %v789 = vrot.slane %v788, 1
    %v790 = vadd.f32 %v788, %v789
    %v791 = vmul.f32 %v790, 0.25
    %v792 = vpack.c.bf16 %v791, %v791
    %vm793 = vcmask 1042434
    %vm794 = vsmask.f32 2304
    %vm795 = vmand %vm793, %vm794
    %v796 = vld [vmem:[#allocation6] sm:$0x4]
    %v797 = vsel %vm795, %v792, %v796
    %798 = vst [vmem:[#allocation6] sm:$0x4] %v797
    %v799 = vld [vmem:[#allocation2 + $0x14] sm:$0xf]
    %v800 = vsel %vm721, %v799, 0.0
    %v801 = vrot.slane %v800, 4
    %v802 = vadd.f32 %v800, %v801
    %v803 = vrot.slane %v802, 2
    %v804 = vadd.f32 %v802, %v803
    %v805 = vrot.slane %v804, 1
    %v806 = vadd.f32 %v804, %v805
    %v807 = vmul.f32 %v806, 0.25
    %v808 = vpack.c.bf16 %v807, %v807
    %vm809 = vsmask.f32 7946
    %vm810 = vmand %vm793, %vm809
    %v811 = vld [vmem:[#allocation6] sm:$0x4]
    %v812 = vsel %vm810, %v808, %v811
    %813 = vst [vmem:[#allocation6] sm:$0x4] %v812
    %v814 = vld [vmem:[#allocation2 + $0x18] sm:$0xf]
    %v815 = vsel %vm721, %v814, 0.0
    %v816 = vrot.slane %v815, 4
    %v817 = vadd.f32 %v815, %v816
    %v818 = vrot.slane %v817, 2
    %v819 = vadd.f32 %v817, %v818
    %v820 = vrot.slane %v819, 1
    %v821 = vadd.f32 %v819, %v820
    %v822 = vmul.f32 %v821, 0.25
    %v823 = vpack.c.bf16 %v822, %v822
    %vm824 = vcmask 1043459
    %vm825 = vsmask.f32 3328
    %vm826 = vmand %vm824, %vm825
    %v827 = vld [vmem:[#allocation6] sm:$0x8]
    %v828 = vsel %vm826, %v823, %v827
    %829 = vst [vmem:[#allocation6] sm:$0x8] %v828
    %v830 = vld [vmem:[#allocation2 + $0x1c] sm:$0xf]
    %v831 = vsel %vm721, %v830, 0.0
    %v832 = vrot.slane %v831, 4
    %v833 = vadd.f32 %v831, %v832
    %v834 = vrot.slane %v833, 2
    %v835 = vadd.f32 %v833, %v834
    %v836 = vrot.slane %v835, 1
    %v837 = vadd.f32 %v835, %v836
    %v838 = vmul.f32 %v837, 0.25
    %v839 = vpack.c.bf16 %v838, %v838
    %vm840 = vsmask.f32 7950
    %vm841 = vmand %vm824, %vm840
    %v842 = vld [vmem:[#allocation6] sm:$0x8]
    %v843 = vsel %vm841, %v839, %v842
    %844 = vst [vmem:[#allocation6] sm:$0x8] %v843
    // Predicated region
    $region130: #{tpu_custom_call.1} parent=1 // pred_check
      _
    $region131: #{tpu_custom_call.1} parent=1 // pred_check_branch
      %846 = sbr.rel (0) target = $region133
    $region132: #{tpu_custom_call.1} parent=1 // pred_region
      %848 = vsyncadd [#allocation7], 0
      %s850 = sshll.u32 [#allocation6], 4
      %s851 = int_to_ptr.vmem [resolvable:$true] %s850
      %s852 = sshll.u32 %s2, 4
      %s853 = int_to_ptr.hbm [resolvable:$true] %s852
      %855 = dma.vmem_to_hbm [thread:$0]  %s851, 64, %s853, [#allocation7]
    $region133: #{tpu_custom_call.1} parent=1 // pred_fallthru
      _
    // Predicated region
    $region134: #{tpu_custom_call.1} parent=1 // pred_check
      _
    $region135: #{tpu_custom_call.1} parent=1 // pred_check_branch
      %857 = sbr.rel (0) target = $region137
    $region136: #{tpu_custom_call.1} parent=1 // pred_region
      %859 = dma.done [#allocation7], 64
    $region137: #{tpu_custom_call.1} parent=1 // pred_fallthru
      _
    %860 = vsyncpa [#allocation7], 1
  %861 = vsyncmov [#allocation3]
  %s862 = vpop.sfrf %861
  %p863 = scmp.eq.s32.totalorder %s862, 0
  %p864 = pneg %p863
  %866 = shalt.err (%p864)

</llo_original>
